<compile_context>
chip_gen: v7x
topology: tpu7x:2x2x1
jax: 0.10.0
libtpu: 0.0.40
codegen_flags: <defaults>
</compile_context>

<pallas_src>
import jax
import jax.numpy as jnp
from jax import lax
from jax.experimental import pallas as pl
from jax.experimental.pallas import tpu as pltpu


def _round_up(x, m):
    return (x + m - 1) // m * m


def _vmem_budget_bytes():
    """Generation-aware VMEM budget (leave ~25% headroom for the compiler)."""
    cap = 128 * 2**20
    try:
        info = pltpu.get_tpu_info()
        cap = int(getattr(info, "vmem_capacity_bytes", cap))
    except Exception:
        cap = 64 * 2**20          # conservative (v7x-sized) fallback
    return min(100 * 2**20, (3 * cap) // 4)


def _attn_vmem_bytes(n, tq, cpad, cqp):
    bf16, f32 = 2, 4
    return (
        2 * tq * cqp * bf16        # q tile (double-buffered)
        + 2 * n * cqp * bf16       # K full (double-buffered)
        + 2 * n * cpad * bf16      # V full (double-buffered)
        + 2 * tq * cpad * f32      # x residual tile
        + 2 * tq * cpad * f32      # output tile
        + 2 * tq * n * f32         # energy + p (f32)
        + tq * n * bf16            # p bf16 copy
        + 2 * tq * cpad * f32      # out temporaries
    )


def _proj_vmem_bytes(tn, cpad, cqp):
    bf16, f32 = 2, 4
    return (
        2 * tn * cpad * bf16                           # x tile
        + cpad * 2 * cqp * bf16 + cpad * cpad * bf16   # fused Wqk, Wv
        + 2 * cqp * f32 + cpad * f32                   # biases
        + 2 * 2 * tn * cqp * bf16                      # q + k outputs
        + 2 * tn * cpad * bf16                         # v output
        + tn * (2 * cqp + cpad) * f32                  # f32 temporaries
    )


def _pick_tq(n, cpad, cqp, budget):
    """Largest query tile (prefer 256 for v6e/v7x MXU) that fits the budget."""
    if n <= 256:
        return n
    for t in (256, 128, 64, 32, 16, 8):
        if n % t == 0 and 2 * _attn_vmem_bytes(n, t, cpad, cqp) <= budget:
            return t
    for t in (8, 16, 32, 64, 128, 256):   # over budget: take the smallest divisor
        if n % t == 0:
            return t
    raise ValueError(f"N={n} has no supported query-tile divisor (pad H*W).")


def _qkv_projection_kernel(x_ref, wqk_ref, bqk_ref, wv_ref, bv_ref,
                           q_ref, k_ref, v_ref):
    """Hoisted 1x1-conv projections: run once per (batch, seq-tile)."""
    x = x_ref[0]                                   # (TN, Cpad) bf16
    cqp = q_ref.shape[-1]
    # Fused Q|K projection: bf16 operands, f32 accumulation, f32 bias add.
    qk = jnp.dot(x, wqk_ref[...], preferred_element_type=jnp.float32) + bqk_ref[...]
    q_ref[0] = qk[:, :cqp].astype(q_ref.dtype)
    k_ref[0] = qk[:, cqp:].astype(k_ref.dtype)
    v = jnp.dot(x, wv_ref[...], preferred_element_type=jnp.float32) + bv_ref[...]
    v_ref[0] = v.astype(v_ref.dtype)


def _attention_kernel(q_ref, k_ref, v_ref, x_ref, gamma_ref, o_ref):
    q = q_ref[0]                                   # (TQ, CQP) bf16
    k = k_ref[0]                                   # (N,  CQP) bf16
    v = v_ref[0]                                   # (N,  Cpad) bf16

    # energy[i, j] = <q_i, k_j> : bf16 operands, f32 accumulation, no k.T copy.
    energy = lax.dot_general(
        q, k,
        dimension_numbers=(((1,), (1,)), ((), ())),
        preferred_element_type=jnp.float32)        # (TQ, N) f32

    # Numerically stable softmax; normalization deferred past the matmul.
    m = jnp.max(energy, axis=-1, keepdims=True)
    p = jnp.exp(energy - m)                        # (TQ, N) f32
    denom = jnp.sum(p, axis=-1, keepdims=True)     # (TQ, 1) f32

    # Unnormalized attention @ V on the MXU (bf16 in, f32 accumulate).
    out = jnp.dot(p.astype(jnp.bfloat16), v, preferred_element_type=jnp.float32)
    # Per-row rescale; approx reciprocal uses the EUP slot (fine for inference;
    # switch to approx=False if this feeds training).
    out = out * pl.reciprocal(denom, approx=True)

    gamma = gamma_ref[0]
    o_ref[0] = (gamma * out + x_ref[0]).astype(o_ref.dtype)


def self_attention_pallas_nhwc(x_bnc, wq, bq, wk, bk, wv, bv, gamma, *, tq=None):
    """x_bnc: (B, N, C) f32; wq/wk: (C, C//8); wv: (C, C); biases (1, *); gamma (1,)."""
    B, N, C = x_bnc.shape
    Cq = wq.shape[1]

    Cpad = max(128, _round_up(C, 128))     # lane-dense value/output channels
    CQP = max(128, _round_up(Cq, 128))     # lane-dense query/key channels

    budget = _vmem_budget_bytes()
    TQ = tq if tq is not None else _pick_tq(N, Cpad, CQP, budget)
    assert N % TQ == 0, f"N={N} must be divisible by TQ={TQ}"
    TN = TQ                                # projection seq tile

    # Zero-pad channel dims (exact: padded weight rows/cols and biases are 0),
    # pre-cast the MXU-feeding operands to bf16 once in the wrapper.
    xp_f32 = jnp.pad(x_bnc, ((0, 0), (0, 0), (0, Cpad - C)))
    xp_bf16 = xp_f32.astype(jnp.bfloat16)
    wqk = jnp.concatenate(
        [jnp.pad(wq, ((0, Cpad - C), (0, CQP - Cq))),
         jnp.pad(wk, ((0, Cpad - C), (0, CQP - Cq)))], axis=1).astype(jnp.bfloat16)
    bqk = jnp.concatenate(
        [jnp.pad(bq, ((0, 0), (0, CQP - Cq))),
         jnp.pad(bk, ((0, 0), (0, CQP - Cq)))], axis=1)            # f32
    wvp = jnp.pad(wv, ((0, Cpad - C), (0, Cpad - C))).astype(jnp.bfloat16)
    bvp = jnp.pad(bv, ((0, 0), (0, Cpad - C)))                     # f32

    proj_limit = int(min(budget, max(32 * 2**20, 2 * _proj_vmem_bytes(TN, Cpad, CQP))))
    attn_limit = int(min(budget, max(32 * 2**20, 2 * _attn_vmem_bytes(N, TQ, Cpad, CQP))))

    # --- Pass 1: hoisted Q/K/V projections (one x read per seq tile). ---
    q_all, k_all, v_all = pl.pallas_call(
        _qkv_projection_kernel,
        out_shape=(jax.ShapeDtypeStruct((B, N, CQP), jnp.bfloat16),
                   jax.ShapeDtypeStruct((B, N, CQP), jnp.bfloat16),
                   jax.ShapeDtypeStruct((B, N, Cpad), jnp.bfloat16)),
        grid_spec=pltpu.PrefetchScalarGridSpec(
            num_scalar_prefetch=0,
            grid=(B, N // TN),
            in_specs=[
                pl.BlockSpec((1, TN, Cpad), lambda b, i: (b, i, 0)),   # x (bf16)
                pl.BlockSpec((Cpad, 2 * CQP), lambda b, i: (0, 0)),    # Wq|Wk fused
                pl.BlockSpec((1, 2 * CQP), lambda b, i: (0, 0)),       # bq|bk
                pl.BlockSpec((Cpad, Cpad), lambda b, i: (0, 0)),       # Wv
                pl.BlockSpec((1, Cpad), lambda b, i: (0, 0)),          # bv
            ],
            out_specs=[
                pl.BlockSpec((1, TN, CQP), lambda b, i: (b, i, 0)),    # Q
                pl.BlockSpec((1, TN, CQP), lambda b, i: (b, i, 0)),    # K
                pl.BlockSpec((1, TN, Cpad), lambda b, i: (b, i, 0)),   # V
            ],
        ),
        compiler_params=pltpu.CompilerParams(
            dimension_semantics=("parallel", "parallel"),
            vmem_limit_bytes=proj_limit,
        ),
    )(xp_bf16, wqk, bqk, wvp, bvp)

    # --- Pass 2: query-tiled attention + residual. ---
    out_padded = pl.pallas_call(
        _attention_kernel,
        out_shape=jax.ShapeDtypeStruct((B, N, Cpad), jnp.float32),
        grid_spec=pltpu.PrefetchScalarGridSpec(
            num_scalar_prefetch=0,
            grid=(B, N // TQ),
            in_specs=[
                pl.BlockSpec((1, TQ, CQP), lambda b, qi: (b, qi, 0)),   # Q tile
                pl.BlockSpec((1, N, CQP), lambda b, qi: (b, 0, 0)),     # K full
                pl.BlockSpec((1, N, Cpad), lambda b, qi: (b, 0, 0)),    # V full
                pl.BlockSpec((1, TQ, Cpad), lambda b, qi: (b, qi, 0)),  # x residual (f32)
                pl.BlockSpec(memory_space=pltpu.SMEM),                  # gamma scalar
            ],
            out_specs=pl.BlockSpec((1, TQ, Cpad), lambda b, qi: (b, qi, 0)),
        ),
        compiler_params=pltpu.CompilerParams(
            dimension_semantics=("parallel", "parallel"),
            vmem_limit_bytes=attn_limit,
        ),
    )(q_all, k_all, v_all, xp_f32, gamma)

    return out_padded[:, :, :C]


def self_attention_pallas(x_nchw, wq, bq, wk, bk, wv, bv, gamma, *, tq=None):
    """Module-compatible entry: x_nchw (B, C, H, W) f32, NCHW in/out.
    NCHW<->NHWC transposes live here only to honor the PyTorch contract."""
    B, C, H, W = x_nchw.shape
    N = H * W
    x_bnc = jnp.transpose(x_nchw, (0, 2, 3, 1)).reshape(B, N, C)
    out_bnc = self_attention_pallas_nhwc(x_bnc, wq, bq, wk, bk, wv, bv, gamma, tq=tq)
    return jnp.transpose(out_bnc.reshape(B, H, W, C), (0, 3, 1, 2))


def self_attention_ref(x_nchw, wq, bq, wk, bk, wv, bv, gamma):
    """Pure-JAX reference (mirrors the PyTorch forward)."""
    B, C, H, W = x_nchw.shape
    N = H * W
    x_bnc = jnp.transpose(x_nchw, (0, 2, 3, 1)).reshape(B, N, C)
    q = x_bnc @ wq + bq                 # (B, N, Cq)
    k = x_bnc @ wk + bk                 # (B, N, Cq)
    v = x_bnc @ wv + bv                 # (B, N, C)
    energy = jnp.einsum('bic,bjc->bij', q, k)
    attn = jax.nn.softmax(energy, axis=-1)
    out = jnp.einsum('bij,bjc->bic', attn, v)
    out = gamma[0] * out + x_bnc
    return jnp.transpose(out.reshape(B, H, W, C), (0, 3, 1, 2))


if __name__ == "__main__":
    B, C, H, W = 2, 16, 16, 16          # in_channels=16 -> query/key channels = 16 // 8 = 2
    Cq = C // 8

    key = jax.random.PRNGKey(0)
    kx, kq, kkq, kk, kkk, kv, kkv = jax.random.split(key, 7)

    x = jax.random.normal(kx, (B, C, H, W), dtype=jnp.float32)

    # Deterministic parameter init (Conv2d 1x1 weights stored as (C_in, C_out)).
    wq = jax.random.normal(kq, (C, Cq), dtype=jnp.float32) * 0.1
    bq = jax.random.normal(kkq, (1, Cq), dtype=jnp.float32) * 0.1
    wk = jax.random.normal(kk, (C, Cq), dtype=jnp.float32) * 0.1
    bk = jax.random.normal(kkk, (1, Cq), dtype=jnp.float32) * 0.1
    wv = jax.random.normal(kv, (C, C), dtype=jnp.float32) * 0.1
    bv = jax.random.normal(kkv, (1, C), dtype=jnp.float32) * 0.1

    # nn.Parameter(torch.zeros(1)) -> gamma initialized to 0 (output == x at init).
    gamma0 = jnp.zeros((1,), dtype=jnp.float32)
    # Also validate the full attention path with a nonzero gamma.
    gamma1 = jnp.array([0.5], dtype=jnp.float32)

    out0 = jax.block_until_ready(
        self_attention_pallas(x, wq, bq, wk, bk, wv, bv, gamma0))
    ref0 = self_attention_ref(x, wq, bq, wk, bk, wv, bv, gamma0)

    out1 = jax.block_until_ready(
        self_attention_pallas(x, wq, bq, wk, bk, wv, bv, gamma1))
    ref1 = self_attention_ref(x, wq, bq, wk, bk, wv, bv, gamma1)

    assert out0.shape == (B, C, H, W)
    # gamma = 0: output must equal the input exactly (f32 residual path).
    assert jnp.allclose(out0, ref0, atol=1e-5, rtol=1e-5)
    # gamma != 0: bf16 operands on all four matmuls + approx reciprocal
    # -> looser tolerance (f32 accumulation and f32 softmax keep it small).
    assert jnp.allclose(out1, ref1, atol=2e-2, rtol=2e-2)

    print("KERNEL_OK")
</pallas_src>

<mosaic_0001>
module attributes {stable_mosaic.version = 11 : i64} {
  func.func @_qkv_projection_kernel(%arg0: i32, %arg1: i32, %arg2: memref<1x256x128xbf16, #tpu.memory_space<vmem>>, %arg3: memref<128x256xbf16, #tpu.memory_space<vmem>>, %arg4: memref<1x256xf32, #tpu.memory_space<vmem>>, %arg5: memref<128x128xbf16, #tpu.memory_space<vmem>>, %arg6: memref<1x128xf32, #tpu.memory_space<vmem>>, %arg7: memref<1x256x128xbf16, #tpu.memory_space<vmem>>, %arg8: memref<1x256x128xbf16, #tpu.memory_space<vmem>>, %arg9: memref<1x256x128xbf16, #tpu.memory_space<vmem>>) attributes {dimension_semantics = [#tpu.dimension_semantics<parallel>, #tpu.dimension_semantics<parallel>], iteration_bounds = array<i64: 2, 1>, scalar_prefetch = 0 : i64, scratch_operands = 0 : i64, tpu.core_type = #tpu.core_type<tc>, window_params = [{transform_indices = @transform_0, window_bounds = array<i64: 1, 256, 128>}, {pipeline_mode = #tpu.pipeline_mode<synchronous>, transform_indices = @transform_1, window_bounds = array<i64: 128, 256>}, {pipeline_mode = #tpu.pipeline_mode<synchronous>, transform_indices = @transform_2, window_bounds = array<i64: 1, 256>}, {pipeline_mode = #tpu.pipeline_mode<synchronous>, transform_indices = @transform_3, window_bounds = array<i64: 128, 128>}, {pipeline_mode = #tpu.pipeline_mode<synchronous>, transform_indices = @transform_4, window_bounds = array<i64: 1, 128>}, {transform_indices = @transform_5, window_bounds = array<i64: 1, 256, 128>}, {transform_indices = @transform_6, window_bounds = array<i64: 1, 256, 128>}, {transform_indices = @transform_7, window_bounds = array<i64: 1, 256, 128>}]} {
    %c0 = arith.constant 0 : index
    %c0_0 = arith.constant 0 : index
    %c0_1 = arith.constant 0 : index
    %0 = vector.load %arg2[%c0, %c0_0, %c0_1] : memref<1x256x128xbf16, #tpu.memory_space<vmem>>, vector<1x256x128xbf16>
    %1 = vector.shape_cast %0 : vector<1x256x128xbf16> to vector<256x128xbf16>
    %c0_2 = arith.constant 0 : index
    %c0_3 = arith.constant 0 : index
    %2 = vector.load %arg3[%c0_2, %c0_3] : memref<128x256xbf16, #tpu.memory_space<vmem>>, vector<128x256xbf16>
    %cst = arith.constant dense<0.000000e+00> : vector<256x256xf32>
    %3 = tpu.matmul %1, %2, %cst {dimension_numbers = #tpu.dot_dimension_numbers<[1], [0], [0], [1], [0, 0, 1, 1], [], []>} : vector<256x128xbf16>, vector<128x256xbf16>, vector<256x256xf32> -> vector<256x256xf32>
    %c0_4 = arith.constant 0 : index
    %c0_5 = arith.constant 0 : index
    %4 = vector.load %arg4[%c0_4, %c0_5] : memref<1x256xf32, #tpu.memory_space<vmem>>, vector<1x256xf32>
    %5 = vector.broadcast %4 : vector<1x256xf32> to vector<256x256xf32>
    %6 = arith.addf %3, %5 : vector<256x256xf32>
    %7 = vector.extract_strided_slice %6 {offsets = [0, 0], sizes = [256, 128], strides = [1, 1]} : vector<256x256xf32> to vector<256x128xf32>
    %8 = arith.truncf %7 : vector<256x128xf32> to vector<256x128xbf16>
    %c0_6 = arith.constant 0 : index
    %c0_7 = arith.constant 0 : index
    %c0_8 = arith.constant 0 : index
    %9 = vector.load %arg7[%c0_6, %c0_7, %c0_8] : memref<1x256x128xbf16, #tpu.memory_space<vmem>>, vector<1x256x128xbf16>
    %10 = vector.shape_cast %9 : vector<1x256x128xbf16> to vector<256x128xbf16>
    %11 = vector.shape_cast %8 : vector<256x128xbf16> to vector<1x256x128xbf16>
    tpu.vector_store %arg7[%c0_6, %c0_7, %c0_8], %11 {strides = array<i32>} : memref<1x256x128xbf16, #tpu.memory_space<vmem>>, vector<1x256x128xbf16>,
    %12 = vector.extract_strided_slice %6 {offsets = [0, 128], sizes = [256, 128], strides = [1, 1]} : vector<256x256xf32> to vector<256x128xf32>
    %13 = arith.truncf %12 : vector<256x128xf32> to vector<256x128xbf16>
    %c0_9 = arith.constant 0 : index
    %c0_10 = arith.constant 0 : index
    %c0_11 = arith.constant 0 : index
    %14 = vector.load %arg8[%c0_9, %c0_10, %c0_11] : memref<1x256x128xbf16, #tpu.memory_space<vmem>>, vector<1x256x128xbf16>
    %15 = vector.shape_cast %14 : vector<1x256x128xbf16> to vector<256x128xbf16>
    %16 = vector.shape_cast %13 : vector<256x128xbf16> to vector<1x256x128xbf16>
    tpu.vector_store %arg8[%c0_9, %c0_10, %c0_11], %16 {strides = array<i32>} : memref<1x256x128xbf16, #tpu.memory_space<vmem>>, vector<1x256x128xbf16>,
    %c0_12 = arith.constant 0 : index
    %c0_13 = arith.constant 0 : index
    %17 = vector.load %arg5[%c0_12, %c0_13] : memref<128x128xbf16, #tpu.memory_space<vmem>>, vector<128x128xbf16>
    %cst_14 = arith.constant dense<0.000000e+00> : vector<256x128xf32>
    %18 = tpu.matmul %1, %17, %cst_14 {dimension_numbers = #tpu.dot_dimension_numbers<[1], [0], [0], [1], [0, 0, 1, 1], [], []>} : vector<256x128xbf16>, vector<128x128xbf16>, vector<256x128xf32> -> vector<256x128xf32>
    %c0_15 = arith.constant 0 : index
    %c0_16 = arith.constant 0 : index
    %19 = vector.load %arg6[%c0_15, %c0_16] : memref<1x128xf32, #tpu.memory_space<vmem>>, vector<1x128xf32>
    %20 = vector.broadcast %19 : vector<1x128xf32> to vector<256x128xf32>
    %21 = arith.addf %18, %20 : vector<256x128xf32>
    %22 = arith.truncf %21 : vector<256x128xf32> to vector<256x128xbf16>
    %c0_17 = arith.constant 0 : index
    %c0_18 = arith.constant 0 : index
    %c0_19 = arith.constant 0 : index
    %23 = vector.load %arg9[%c0_17, %c0_18, %c0_19] : memref<1x256x128xbf16, #tpu.memory_space<vmem>>, vector<1x256x128xbf16>
    %24 = vector.shape_cast %23 : vector<1x256x128xbf16> to vector<256x128xbf16>
    %25 = vector.shape_cast %22 : vector<256x128xbf16> to vector<1x256x128xbf16>
    tpu.vector_store %arg9[%c0_17, %c0_18, %c0_19], %25 {strides = array<i32>} : memref<1x256x128xbf16, #tpu.memory_space<vmem>>, vector<1x256x128xbf16>,
    return
  }
  func.func @transform_0(%arg0: i32, %arg1: i32) -> (i32, i32, i32) {
    %c0_i32 = arith.constant 0 : i32
    %c0_i32_0 = arith.constant 0 : i32
    return %arg0, %arg1, %c0_i32 : i32, i32, i32
  }
  func.func @transform_1(%arg0: i32, %arg1: i32) -> (i32, i32) {
    %c0_i32 = arith.constant 0 : i32
    %c0_i32_0 = arith.constant 0 : i32
    %c0_i32_1 = arith.constant 0 : i32
    return %c0_i32, %c0_i32_0 : i32, i32
  }
  func.func @transform_2(%arg0: i32, %arg1: i32) -> (i32, i32) {
    %c0_i32 = arith.constant 0 : i32
    %c0_i32_0 = arith.constant 0 : i32
    %c0_i32_1 = arith.constant 0 : i32
    return %c0_i32, %c0_i32_0 : i32, i32
  }
  func.func @transform_3(%arg0: i32, %arg1: i32) -> (i32, i32) {
    %c0_i32 = arith.constant 0 : i32
    %c0_i32_0 = arith.constant 0 : i32
    %c0_i32_1 = arith.constant 0 : i32
    return %c0_i32, %c0_i32_0 : i32, i32
  }
  func.func @transform_4(%arg0: i32, %arg1: i32) -> (i32, i32) {
    %c0_i32 = arith.constant 0 : i32
    %c0_i32_0 = arith.constant 0 : i32
    %c0_i32_1 = arith.constant 0 : i32
    return %c0_i32, %c0_i32_0 : i32, i32
  }
  func.func @transform_5(%arg0: i32, %arg1: i32) -> (i32, i32, i32) {
    %c0_i32 = arith.constant 0 : i32
    %c0_i32_0 = arith.constant 0 : i32
    return %arg0, %arg1, %c0_i32 : i32, i32, i32
  }
  func.func @transform_6(%arg0: i32, %arg1: i32) -> (i32, i32, i32) {
    %c0_i32 = arith.constant 0 : i32
    %c0_i32_0 = arith.constant 0 : i32
    return %arg0, %arg1, %c0_i32 : i32, i32, i32
  }
  func.func @transform_7(%arg0: i32, %arg1: i32) -> (i32, i32, i32) {
    %c0_i32 = arith.constant 0 : i32
    %c0_i32_0 = arith.constant 0 : i32
    return %arg0, %arg1, %c0_i32 : i32, i32, i32
  }
}

</mosaic_0001>

<llo_original>
// kernel: tpu_custom_call.1
$region0: #{tpu_custom_call.1}
  #allocation0 [shape = 'u32[]', space=smem, size = 0x4, offset = 0x4, fixed_abs, tag = 'smem constant byte address 0x4 - core index']
  #allocation1 [shape = 'u32[144,128]{1,0:T(1,128)}', space=vmem, size = 0x12000, scoped, tag = 'internal scratch']
  %s0 = inlined_call_operand.hbm [shape: bf16[2,256,128], index: 0, kind: input, shape index: {}]
  %s1 = inlined_call_operand.hbm [shape: bf16[128,256], index: 1, kind: input, shape index: {}]
  %s2 = inlined_call_operand.vmem [shape: f32[1,256], index: 2, kind: input, shape index: {}]
  %s3 = inlined_call_operand.hbm [shape: bf16[128,128], index: 3, kind: input, shape index: {}]
  %s4 = inlined_call_operand.vmem [shape: f32[1,128], index: 4, kind: input, shape index: {}]
  %s5 = inlined_call_operand.hbm [shape: bf16[2,256,128], index: 5, kind: output, shape index: {0}]
  %s6 = inlined_call_operand.hbm [shape: bf16[2,256,128], index: 6, kind: output, shape index: {1}]
  %s7 = inlined_call_operand.hbm [shape: bf16[2,256,128], index: 7, kind: output, shape index: {2}]
  %8 = xla_tuple %s5, %s6, %s7
  %s9 = sld [smem:[#allocation0]]
  $region81: #{tpu_custom_call.1} parent=0
    _
  %s11 = ssub.s32 1, %s9
  %s12 = scalar_select 0, %s11, %s9
  $region1: #{tpu_custom_call.1} parent=0
    #allocation2 [shape = 'u8[131072]{0}', space=vmem, size = 0x20000, scoped, tag = 'input window, operand 0']
    #allocation3 [shape = 's32[2]{0}', space=sflag, size = 0x8, scoped, tag = 'scoped memory for tpu_custom_call.1']
    #allocation4 [shape = 's32[2]{0}', space=sflag, size = 0x8, scoped, tag = 'scoped memory for tpu_custom_call.1']
    #allocation5 [shape = 'u8[65536]{0}', space=vmem, size = 0x10000, scoped, tag = 'input window, operand 1, single buffered']
    #allocation6 [shape = 's32[1]{0}', space=sflag, size = 0x4, scoped, tag = 'scoped memory for tpu_custom_call.1']
    #allocation7 [shape = 'u8[32768]{0}', space=vmem, size = 0x8000, scoped, tag = 'input window, operand 3, single buffered']
    #allocation8 [shape = 'u8[131072]{0}', space=vmem, size = 0x20000, scoped, tag = 'output window, operand 0']
    #allocation9 [shape = 'u8[131072]{0}', space=vmem, size = 0x20000, scoped, tag = 'output window, operand 1']
    #allocation10 [shape = 's32[2]{0}', space=sflag, size = 0x8, scoped, tag = 'scoped memory for tpu_custom_call.1']
    #allocation11 [shape = 'u8[131072]{0}', space=vmem, size = 0x20000, scoped, tag = 'output window, operand 2']
    %13 = vsyncpa [#allocation3], 0
    %s14 = scalar_lea.sflag [#allocation3], 1
    %15 = vsyncpa %s14, 0
    %16 = vsyncpa [#allocation6], 0
    %17 = vsyncpa [#allocation4], 0
    %s18 = scalar_lea.sflag [#allocation4], 1
    %19 = vsyncpa %s18, 0
    %20 = vsyncpa [#allocation10], 0
    %s21 = scalar_lea.sflag [#allocation10], 1
    %22 = vsyncpa %s21, 0
    loop: start=0, step=1, limit=4
    $region2: #{tpu_custom_call.1} parent=1 // loop_pre_header
      _
    $region3: #{tpu_custom_call.1} parent=1 // loop_header
      %s24 = sphi 0, %s28
      %p25 = scmp.ge.s32.totalorder %s24, 4
      %s31 = sphi 0, %s43
      %s32 = sphi 0, %s39
      %s33 = sphi 0, %s31
      %s34 = sphi 0, %s32
      %s35 = sphi 0, %s33
      %s36 = sphi 0, %s34
      %s48 = sphi 0, %s50
      %s51 = sphi 0, %s48
      %s52 = sphi 0, %s51
      %s68 = sphi 0, %s52
      %s72 = sphi 0, %s72
      %s74 = sphi 0, %s72
      %s75 = sphi 0, %s74
      %s89 = sphi 0, %s75
      %s93 = sphi 0, %s93
      %s95 = sphi 0, %s93
      %s96 = sphi 0, %s95
      %s110 = sphi 0, %s96
      %s114 = sphi 0, %s114
      %s116 = sphi 0, %s114
      %s117 = sphi 0, %s116
      %s131 = sphi 0, %s117
      %s135 = sphi 0, %s135
      %s137 = sphi 0, %s135
      %s138 = sphi 0, %s137
      %s152 = sphi 0, %s138
      %s160 = sphi 0, %s162
      %s163 = sphi 0, %s160
      %s164 = sphi 0, %s163
      %s180 = sphi 0, %s164
      %s188 = sphi 0, %s190
      %s191 = sphi 0, %s188
      %s192 = sphi 0, %s191
      %s208 = sphi 0, %s192
      %s216 = sphi 0, %s218
      %s219 = sphi 0, %s216
      %s220 = sphi 0, %s219
      %s236 = sphi 0, %s220
    $region4: #{tpu_custom_call.1} parent=1 // loop_header_branch
      %27 = sbr.rel (%p25) target = $region8
    $region5: #{tpu_custom_call.1} parent=1 // loop_body
      %s29 = ssub.s32 %s24, 1
      %s30 = ssub.s32 %s24, 2
      %s37 = sadd.s32 1, %s32
      %p38 = scmp.ge.s32.totalorder %s37, 1
      %s39 = scalar_select %p38, 0, %s37
      %s40 = sadd.s32 1, %s31
      %s41 = scalar_select %p38, %s40, %s31
      %p42 = scmp.ge.s32.totalorder %s41, 2
      %s43 = scalar_select %p42, 0, %s41
      %s44 = ssub.s32 %s31, %s43
      %s45 = ssub.s32 %s32, %s39
      %s46 = sor.u32 %s44, %s45
      %p47 = scmp.eq.s32.totalorder %s46, 0
      %s49 = sadd.s32 %s48, 1
      %s50 = scalar_select %p47, %s48, %s49
      %p53 = pneg %p47
      %p54 = scmp.eq.s32.totalorder %s24, 1
      %p55 = por %p53, %p54
      %p56 = scmp.ne.s32.totalorder %s48, %s51
      %p57 = scmp.eq.s32.totalorder %s24, 0
      %p58 = por %p56, %p57
      %p59 = scmp.ne.s32.totalorder %s48, %s51
      %p60 = scmp.eq.s32.totalorder %s29, 1
      %p61 = por %p59, %p60
      %p62 = scmp.ne.s32.totalorder %s51, %s52
      %p63 = scmp.eq.s32.totalorder %s29, 0
      %p64 = por %p62, %p63
      %p65 = scmp.ne.s32.totalorder %s51, %s52
      %p66 = scmp.eq.s32.totalorder %s30, 1
      %p67 = por %p65, %p66
      %p69 = scmp.ne.s32.totalorder %s52, %s68
      %p70 = scmp.eq.s32.totalorder %s30, 0
      %p71 = por %p69, %p70
      %s73 = sadd.s32 %s72, 1
      %p76 = scmp.eq.s32.totalorder %s24, 1
      %p77 = scmp.ne.s32.totalorder %s72, %s74
      %p78 = scmp.eq.s32.totalorder %s24, 0
      %p79 = por %p77, %p78
      %p80 = scmp.ne.s32.totalorder %s72, %s74
      %p81 = scmp.eq.s32.totalorder %s29, 1
      %p82 = por %p80, %p81
      %p83 = scmp.ne.s32.totalorder %s74, %s75
      %p84 = scmp.eq.s32.totalorder %s29, 0
      %p85 = por %p83, %p84
      %p86 = scmp.ne.s32.totalorder %s74, %s75
      %p87 = scmp.eq.s32.totalorder %s30, 1
      %p88 = por %p86, %p87
      %p90 = scmp.ne.s32.totalorder %s75, %s89
      %p91 = scmp.eq.s32.totalorder %s30, 0
      %p92 = por %p90, %p91
      %s94 = sadd.s32 %s93, 1
      %p97 = scmp.eq.s32.totalorder %s24, 1
      %p98 = scmp.ne.s32.totalorder %s93, %s95
      %p99 = scmp.eq.s32.totalorder %s24, 0
      %p100 = por %p98, %p99
      %p101 = scmp.ne.s32.totalorder %s93, %s95
      %p102 = scmp.eq.s32.totalorder %s29, 1
      %p103 = por %p101, %p102
      %p104 = scmp.ne.s32.totalorder %s95, %s96
      %p105 = scmp.eq.s32.totalorder %s29, 0
      %p106 = por %p104, %p105
      %p107 = scmp.ne.s32.totalorder %s95, %s96
      %p108 = scmp.eq.s32.totalorder %s30, 1
      %p109 = por %p107, %p108
      %p111 = scmp.ne.s32.totalorder %s96, %s110
      %p112 = scmp.eq.s32.totalorder %s30, 0
      %p113 = por %p111, %p112
      %s115 = sadd.s32 %s114, 1
      %p118 = scmp.eq.s32.totalorder %s24, 1
      %p119 = scmp.ne.s32.totalorder %s114, %s116
      %p120 = scmp.eq.s32.totalorder %s24, 0
      %p121 = por %p119, %p120
      %p122 = scmp.ne.s32.totalorder %s114, %s116
      %p123 = scmp.eq.s32.totalorder %s29, 1
      %p124 = por %p122, %p123
      %p125 = scmp.ne.s32.totalorder %s116, %s117
      %p126 = scmp.eq.s32.totalorder %s29, 0
      %p127 = por %p125, %p126
      %p128 = scmp.ne.s32.totalorder %s116, %s117
      %p129 = scmp.eq.s32.totalorder %s30, 1
      %p130 = por %p128, %p129
      %p132 = scmp.ne.s32.totalorder %s117, %s131
      %p133 = scmp.eq.s32.totalorder %s30, 0
      %p134 = por %p132, %p133
      %s136 = sadd.s32 %s135, 1
      %p139 = scmp.eq.s32.totalorder %s24, 1
      %p140 = scmp.ne.s32.totalorder %s135, %s137
      %p141 = scmp.eq.s32.totalorder %s24, 0
      %p142 = por %p140, %p141
      %p143 = scmp.ne.s32.totalorder %s135, %s137
      %p144 = scmp.eq.s32.totalorder %s29, 1
      %p145 = por %p143, %p144
      %p146 = scmp.ne.s32.totalorder %s137, %s138
      %p147 = scmp.eq.s32.totalorder %s29, 0
      %p148 = por %p146, %p147
      %p149 = scmp.ne.s32.totalorder %s137, %s138
      %p150 = scmp.eq.s32.totalorder %s30, 1
      %p151 = por %p149, %p150
      %p153 = scmp.ne.s32.totalorder %s138, %s152
      %p154 = scmp.eq.s32.totalorder %s30, 0
      %p155 = por %p153, %p154
      %s156 = ssub.s32 %s31, %s43
      %s157 = ssub.s32 %s32, %s39
      %s158 = sor.u32 %s156, %s157
      %p159 = scmp.eq.s32.totalorder %s158, 0
      %s161 = sadd.s32 %s160, 1
      %s162 = scalar_select %p159, %s160, %s161
      %p165 = pneg %p159
      %p166 = scmp.eq.s32.totalorder %s24, 1
      %p167 = por %p165, %p166
      %p168 = scmp.ne.s32.totalorder %s160, %s163
      %p169 = scmp.eq.s32.totalorder %s24, 0
      %p170 = por %p168, %p169
      %p171 = scmp.ne.s32.totalorder %s160, %s163
      %p172 = scmp.eq.s32.totalorder %s29, 1
      %p173 = por %p171, %p172
      %p174 = scmp.ne.s32.totalorder %s163, %s164
      %p175 = scmp.eq.s32.totalorder %s29, 0
      %p176 = por %p174, %p175
      %p177 = scmp.ne.s32.totalorder %s163, %s164
      %p178 = scmp.eq.s32.totalorder %s30, 1
      %p179 = por %p177, %p178
      %p181 = scmp.ne.s32.totalorder %s164, %s180
      %p182 = scmp.eq.s32.totalorder %s30, 0
      %p183 = por %p181, %p182
      %s184 = ssub.s32 %s31, %s43
      %s185 = ssub.s32 %s32, %s39
      %s186 = sor.u32 %s184, %s185
      %p187 = scmp.eq.s32.totalorder %s186, 0
      %s189 = sadd.s32 %s188, 1
      %s190 = scalar_select %p187, %s188, %s189
      %p193 = pneg %p187
      %p194 = scmp.eq.s32.totalorder %s24, 1
      %p195 = por %p193, %p194
      %p196 = scmp.ne.s32.totalorder %s188, %s191
      %p197 = scmp.eq.s32.totalorder %s24, 0
      %p198 = por %p196, %p197
      %p199 = scmp.ne.s32.totalorder %s188, %s191
      %p200 = scmp.eq.s32.totalorder %s29, 1
      %p201 = por %p199, %p200
      %p202 = scmp.ne.s32.totalorder %s191, %s192
      %p203 = scmp.eq.s32.totalorder %s29, 0
      %p204 = por %p202, %p203
      %p205 = scmp.ne.s32.totalorder %s191, %s192
      %p206 = scmp.eq.s32.totalorder %s30, 1
      %p207 = por %p205, %p206
      %p209 = scmp.ne.s32.totalorder %s192, %s208
      %p210 = scmp.eq.s32.totalorder %s30, 0
      %p211 = por %p209, %p210
      %s212 = ssub.s32 %s31, %s43
      %s213 = ssub.s32 %s32, %s39
      %s214 = sor.u32 %s212, %s213
      %p215 = scmp.eq.s32.totalorder %s214, 0
      %s217 = sadd.s32 %s216, 1
      %s218 = scalar_select %p215, %s216, %s217
      %p221 = pneg %p215
      %p222 = scmp.eq.s32.totalorder %s24, 1
      %p223 = por %p221, %p222
      %p224 = scmp.ne.s32.totalorder %s216, %s219
      %p225 = scmp.eq.s32.totalorder %s24, 0
      %p226 = por %p224, %p225
      %p227 = scmp.ne.s32.totalorder %s216, %s219
      %p228 = scmp.eq.s32.totalorder %s29, 1
      %p229 = por %p227, %p228
      %p230 = scmp.ne.s32.totalorder %s219, %s220
      %p231 = scmp.eq.s32.totalorder %s29, 0
      %p232 = por %p230, %p231
      %p233 = scmp.ne.s32.totalorder %s219, %s220
      %p234 = scmp.eq.s32.totalorder %s30, 1
      %p235 = por %p233, %p234
      %p237 = scmp.ne.s32.totalorder %s220, %s236
      %p238 = scmp.eq.s32.totalorder %s30, 0
      %p239 = por %p237, %p238
      %p240 = scmp.le.s32.totalorder 1, %s24
      %p241 = scmp.lt.s32.totalorder %s24, 3
      %p242 = pnand %p240, %p241
      %p243 = pneg %p242
      // Predicated region
      $region9: #{tpu_custom_call.1} parent=5 // pred_check
        _
      $region10: #{tpu_custom_call.1} parent=5 // pred_check_branch
        %245 = sbr.rel (%p242) target = $region12
      $region11: #{tpu_custom_call.1} parent=5 // pred_region
        %s246 = ssub.s32 %s24, 1
        // Predicated region
        $region13: #{tpu_custom_call.1} parent=11 // pred_check
          %p247 = pneg %p85
        $region14: #{tpu_custom_call.1} parent=11 // pred_check_branch
          %249 = sbr.rel (%p247) target = $region16
        $region15: #{tpu_custom_call.1} parent=11 // pred_region
          %s251 = ssub.s32 2048, 2048
          %252 = vsyncadd [#allocation6], %s251
          %s253 = sshll.u32 [#allocation5], 4
          %s254 = int_to_ptr.vmem [resolvable:$true] %s253
          %259 = dma.hbm_to_vmem [thread:$0]  %s1, 2048, %s254, [#allocation6], 128, 128, 8
        $region16: #{tpu_custom_call.1} parent=11 // pred_fallthru
          _
        // Predicated region
        $region17: #{tpu_custom_call.1} parent=11 // pred_check
          %p260 = pneg %p106
        $region18: #{tpu_custom_call.1} parent=11 // pred_check_branch
          %262 = sbr.rel (%p260) target = $region20
        $region19: #{tpu_custom_call.1} parent=11 // pred_region
          _
        $region20: #{tpu_custom_call.1} parent=11 // pred_fallthru
          _
        // Predicated region
        $region21: #{tpu_custom_call.1} parent=11 // pred_check
          %p263 = pneg %p127
        $region22: #{tpu_custom_call.1} parent=11 // pred_check_branch
          %265 = sbr.rel (%p263) target = $region24
        $region23: #{tpu_custom_call.1} parent=11 // pred_region
          %s267 = ssub.s32 1024, 1024
          %268 = vsyncadd [#allocation6], %s267
          %s269 = sshll.u32 [#allocation7], 4
          %s270 = int_to_ptr.vmem [resolvable:$true] %s269
          %275 = dma.hbm_to_vmem [thread:$0]  %s3, 1024, %s270, [#allocation6], 64, 64, 4
        $region24: #{tpu_custom_call.1} parent=11 // pred_fallthru
          _
        // Predicated region
        $region25: #{tpu_custom_call.1} parent=11 // pred_check
          %p276 = pneg %p148
        $region26: #{tpu_custom_call.1} parent=11 // pred_check_branch
          %278 = sbr.rel (%p276) target = $region28
        $region27: #{tpu_custom_call.1} parent=11 // pred_region
          _
        $region28: #{tpu_custom_call.1} parent=11 // pred_fallthru
          _
      $region12: #{tpu_custom_call.1} parent=5 // pred_fallthru
        _
      %p279 = scmp.lt.s32.totalorder %s24, 2
      // Predicated region
      $region29: #{tpu_custom_call.1} parent=5 // pred_check
        %p280 = pneg %p279
      $region30: #{tpu_custom_call.1} parent=5 // pred_check_branch
        %282 = sbr.rel (%p280) target = $region32
      $region31: #{tpu_custom_call.1} parent=5 // pred_region
        // Predicated region
        $region33: #{tpu_custom_call.1} parent=31 // pred_check
          %p283 = pneg %p58
        $region34: #{tpu_custom_call.1} parent=31 // pred_check_branch
          %285 = sbr.rel (%p283) target = $region36
        $region35: #{tpu_custom_call.1} parent=31 // pred_region
          %s286 = sand.u32 %s48, 1
          %s287 = scalar_lea.sflag [#allocation3], %s286
          %s288 = sand.u32 %s48, 1
          %s289 = smul.addr %s288, 128
          %s290 = scalar_lea.vmem [#allocation2], %s289
          %s291 = smul.u32 32, %s32
          %s293 = ssub.s32 2048, 2048
          %294 = vsyncadd %s287, %s293
          %s295 = smul.addr %s31, 32
          %s296 = sadd.s32 %s291, %s295
          %s297 = smul.addr %s296, 64
          %s298 = scalar_lea.hbm %s0, %s297
          %s299 = sshll.u32 %s290, 4
          %s300 = int_to_ptr.vmem [resolvable:$true] %s299
          %305 = dma.hbm_to_vmem [thread:$0]  %s298, 2048, %s300, %s287, 64, 64, 4
        $region36: #{tpu_custom_call.1} parent=31 // pred_fallthru
          _
      $region32: #{tpu_custom_call.1} parent=5 // pred_fallthru
        _
      %p306 = scmp.le.s32.totalorder 1, %s24
      %p307 = scmp.lt.s32.totalorder %s24, 3
      %p308 = pnand %p306, %p307
      %p309 = pneg %p308
      // Predicated region
      $region37: #{tpu_custom_call.1} parent=5 // pred_check
        _
      $region38: #{tpu_custom_call.1} parent=5 // pred_check_branch
        %311 = sbr.rel (%p308) target = $region40
      $region39: #{tpu_custom_call.1} parent=5 // pred_region
        %s312 = ssub.s32 %s24, 1
        %s313 = sand.u32 %s51, 1
        %s314 = scalar_lea.sflag [#allocation3], %s313
        %s315 = sand.u32 %s51, 1
        %s316 = smul.addr %s315, 128
        %s317 = scalar_lea.vmem [#allocation2], %s316
        // Predicated region
        $region41: #{tpu_custom_call.1} parent=39 // pred_check
          %p318 = pneg %p64
        $region42: #{tpu_custom_call.1} parent=39 // pred_check_branch
          %320 = sbr.rel (%p318) target = $region44
        $region43: #{tpu_custom_call.1} parent=39 // pred_region
          %321 = dma.done %s314, 2048
        $region44: #{tpu_custom_call.1} parent=39 // pred_fallthru
          _
        // Predicated region
        $region45: #{tpu_custom_call.1} parent=39 // pred_check
          %p322 = pneg %p85
        $region46: #{tpu_custom_call.1} parent=39 // pred_check_branch
          %324 = sbr.rel (%p322) target = $region48
        $region47: #{tpu_custom_call.1} parent=39 // pred_region
          %325 = dma.done [#allocation6], 2048
        $region48: #{tpu_custom_call.1} parent=39 // pred_fallthru
          _
        // Predicated region
        $region49: #{tpu_custom_call.1} parent=39 // pred_check
          %p326 = pneg %p127
        $region50: #{tpu_custom_call.1} parent=39 // pred_check_branch
          %328 = sbr.rel (%p326) target = $region52
        $region51: #{tpu_custom_call.1} parent=39 // pred_region
          %329 = dma.done [#allocation6], 1024
        $region52: #{tpu_custom_call.1} parent=39 // pred_fallthru
          _
        %s330 = sand.u32 %s51, 1
        %s331 = scalar_lea.sflag [#allocation3], %s330
        %s332 = sand.u32 %s51, 1
        %s333 = smul.addr %s332, 128
        %s334 = scalar_lea.vmem [#allocation2], %s333
        %p335 = pneg %p64
        %p336 = pneg %p61
        %p337 = pneg %p85
        %p338 = pneg %p82
        %p339 = pneg %p106
        %p340 = pneg %p103
        %p341 = pneg %p127
        %p342 = pneg %p124
        %p343 = pneg %p148
        %p344 = pneg %p145
        %p345 = pneg %p176
        %p346 = pneg %p173
        %s347 = sand.u32 %s163, 1
        %s348 = scalar_lea.sflag [#allocation4], %s347
        %s349 = sand.u32 %s163, 1
        %s350 = smul.addr %s349, 128
        %s351 = scalar_lea.vmem [#allocation8], %s350
        %p352 = pneg %p204
        %p353 = pneg %p201
        %s354 = sand.u32 %s29, 1
        %s355 = scalar_lea.sflag [#allocation10], %s354
        %s356 = sand.u32 %s191, 1
        %s357 = smul.addr %s356, 128
        %s358 = scalar_lea.vmem [#allocation9], %s357
        %p359 = pneg %p232
        %p360 = pneg %p229
        %s361 = sand.u32 %s29, 1
        %s362 = scalar_lea.sflag [#allocation10], %s361
        %s363 = sand.u32 %s219, 1
        %s364 = smul.addr %s363, 128
        %s365 = scalar_lea.vmem [#allocation11], %s364
        %s366 = smul.u32 32, %s34
        %s367 = smul.u32 32, %s34
        %s368 = smul.u32 32, %s34
        %s369 = smul.u32 32, %s34
        %v371 = vld [vmem:[%s317] sm:$0xf]
        %v372 = vld [vmem:[%s317 + $0x4] sm:$0xf]
        %v373 = vld [vmem:[%s317 + $0x8] sm:$0xf]
        %v374 = vld [vmem:[%s317 + $0xc] sm:$0xf]
        %v375 = vld [vmem:[%s317 + $0x10] sm:$0xf]
        %v376 = vld [vmem:[%s317 + $0x14] sm:$0xf]
        %v377 = vld [vmem:[%s317 + $0x18] sm:$0xf]
        %v378 = vld [vmem:[%s317 + $0x1c] sm:$0xf]
        %v379 = vld [vmem:[%s317 + $0x20] sm:$0xf]
        %v380 = vld [vmem:[%s317 + $0x24] sm:$0xf]
        %v381 = vld [vmem:[%s317 + $0x28] sm:$0xf]
        %v382 = vld [vmem:[%s317 + $0x2c] sm:$0xf]
        %v383 = vld [vmem:[%s317 + $0x30] sm:$0xf]
        %v384 = vld [vmem:[%s317 + $0x34] sm:$0xf]
        %v385 = vld [vmem:[%s317 + $0x38] sm:$0xf]
        %v386 = vld [vmem:[%s317 + $0x3c] sm:$0xf]
        %v387 = vld [vmem:[%s317 + $0x40] sm:$0xf]
        %v388 = vld [vmem:[%s317 + $0x44] sm:$0xf]
        %v389 = vld [vmem:[%s317 + $0x48] sm:$0xf]
        %v390 = vld [vmem:[%s317 + $0x4c] sm:$0xf]
        %v391 = vld [vmem:[%s317 + $0x50] sm:$0xf]
        %v392 = vld [vmem:[%s317 + $0x54] sm:$0xf]
        %v393 = vld [vmem:[%s317 + $0x58] sm:$0xf]
        %v394 = vld [vmem:[%s317 + $0x5c] sm:$0xf]
        %v395 = vld [vmem:[%s317 + $0x60] sm:$0xf]
        %v396 = vld [vmem:[%s317 + $0x64] sm:$0xf]
        %v397 = vld [vmem:[%s317 + $0x68] sm:$0xf]
        %v398 = vld [vmem:[%s317 + $0x6c] sm:$0xf]
        %v399 = vld [vmem:[%s317 + $0x70] sm:$0xf]
        %v400 = vld [vmem:[%s317 + $0x74] sm:$0xf]
        %v401 = vld [vmem:[%s317 + $0x78] sm:$0xf]
        %v402 = vld [vmem:[%s317 + $0x7c] sm:$0xf]
        %v403 = vld [vmem:[#allocation5] sm:$0xff]
        %v404 = vld [vmem:[#allocation5 + $0x8] sm:$0xff]
        %v405 = vld [vmem:[#allocation5 + $0x10] sm:$0xff]
        %v406 = vld [vmem:[#allocation5 + $0x18] sm:$0xff]
        %v407 = vld [vmem:[#allocation5 + $0x20] sm:$0xff]
        %v408 = vld [vmem:[#allocation5 + $0x28] sm:$0xff]
        %v409 = vld [vmem:[#allocation5 + $0x30] sm:$0xff]
        %v410 = vld [vmem:[#allocation5 + $0x38] sm:$0xff]
        %v411 = vld [vmem:[#allocation5 + $0x40] sm:$0xff]
        %v412 = vld [vmem:[#allocation5 + $0x48] sm:$0xff]
        %v413 = vld [vmem:[#allocation5 + $0x50] sm:$0xff]
        %v414 = vld [vmem:[#allocation5 + $0x58] sm:$0xff]
        %v415 = vld [vmem:[#allocation5 + $0x60] sm:$0xff]
        %v416 = vld [vmem:[#allocation5 + $0x68] sm:$0xff]
        %v417 = vld [vmem:[#allocation5 + $0x70] sm:$0xff]
        %v418 = vld [vmem:[#allocation5 + $0x78] sm:$0xff]
        %v419 = vld [vmem:[%s2] sm:$0x3]
        %v421 = vlaneseq
        %v422 = vshrl.u32 %v421, 7
        %v423 = vsub.s32 0, %v422
        %v424 = vrot.slane %v419, %v423
        %v425 = vlaneseq
        %v426 = vshrl.u32 %v425, 7
        %v427 = vsub.s32 1, %v426
        %v428 = vrot.slane %v419, %v427
        %v463 = vunpack.c.l.b16 %v371
        %v464 = vunpack.c.l.b16 %v372
        %v465 = vunpack.c.l.b16 %v373
        %v466 = vunpack.c.l.b16 %v374
        %v467 = vunpack.c.l.b16 %v375
        %v468 = vunpack.c.l.b16 %v376
        %v469 = vunpack.c.l.b16 %v377
        %v470 = vunpack.c.l.b16 %v378
        %v471 = vunpack.c.l.b16 %v379
        %v472 = vunpack.c.l.b16 %v380
        %v473 = vunpack.c.l.b16 %v381
        %v474 = vunpack.c.l.b16 %v382
        %v475 = vunpack.c.l.b16 %v383
        %v476 = vunpack.c.l.b16 %v384
        %v477 = vunpack.c.l.b16 %v385
        %v478 = vunpack.c.l.b16 %v386
        %v479 = vunpack.c.l.b16 %v387
        %v480 = vunpack.c.l.b16 %v388
        %v481 = vunpack.c.l.b16 %v389
        %v482 = vunpack.c.l.b16 %v390
        %v483 = vunpack.c.l.b16 %v391
        %v484 = vunpack.c.l.b16 %v392
        %v485 = vunpack.c.l.b16 %v393
        %v486 = vunpack.c.l.b16 %v394
        %v487 = vunpack.c.l.b16 %v395
        %v488 = vunpack.c.l.b16 %v396
        %v489 = vunpack.c.l.b16 %v397
        %v490 = vunpack.c.l.b16 %v398
        %v491 = vunpack.c.l.b16 %v399
        %v492 = vunpack.c.l.b16 %v400
        %v493 = vunpack.c.l.b16 %v401
        %v494 = vunpack.c.l.b16 %v402
        %v495 = vpack.c.b16 %v464, %v463
        %v496 = vpack.c.b16 %v466, %v465
        %v497 = vpack.c.b16 %v468, %v467
        %v498 = vpack.c.b16 %v470, %v469
        %v499 = vpack.c.b16 %v472, %v471
        %v500 = vpack.c.b16 %v474, %v473
        %v501 = vpack.c.b16 %v476, %v475
        %v502 = vpack.c.b16 %v478, %v477
        %v503 = vpack.c.b16 %v480, %v479
        %v504 = vpack.c.b16 %v482, %v481
        %v505 = vpack.c.b16 %v484, %v483
        %v506 = vpack.c.b16 %v486, %v485
        %v507 = vpack.c.b16 %v488, %v487
        %v508 = vpack.c.b16 %v490, %v489
        %v509 = vpack.c.b16 %v492, %v491
        %v510 = vpack.c.b16 %v494, %v493
        %v543 = vunpack.c.l.b16 %v403
        %v544 = vunpack.c.h.b16 %v403
        %v545 = vunpack.c.l.b16 %v404
        %v546 = vunpack.c.h.b16 %v404
        %v547 = vunpack.c.l.b16 %v405
        %v548 = vunpack.c.h.b16 %v405
        %v549 = vunpack.c.l.b16 %v406
        %v550 = vunpack.c.h.b16 %v406
        %v551 = vunpack.c.l.b16 %v407
        %v552 = vunpack.c.h.b16 %v407
        %v553 = vunpack.c.l.b16 %v408
        %v554 = vunpack.c.h.b16 %v408
        %v555 = vunpack.c.l.b16 %v409
        %v556 = vunpack.c.h.b16 %v409
        %v557 = vunpack.c.l.b16 %v410
        %v558 = vunpack.c.h.b16 %v410
        %v559 = vunpack.c.l.b16 %v411
        %v560 = vunpack.c.h.b16 %v411
        %v561 = vunpack.c.l.b16 %v412
        %v562 = vunpack.c.h.b16 %v412
        %v563 = vunpack.c.l.b16 %v413
        %v564 = vunpack.c.h.b16 %v413
        %v565 = vunpack.c.l.b16 %v414
        %v566 = vunpack.c.h.b16 %v414
        %v567 = vunpack.c.l.b16 %v415
        %v568 = vunpack.c.h.b16 %v415
        %v569 = vunpack.c.l.b16 %v416
        %v570 = vunpack.c.h.b16 %v416
        %v571 = vunpack.c.l.b16 %v417
        %v572 = vunpack.c.h.b16 %v417
        %v573 = vunpack.c.l.b16 %v418
        %v574 = vunpack.c.h.b16 %v418
        %v575 = vpack.c.b16 %v545, %v543
        %v576 = vpack.c.b16 %v546, %v544
        %v577 = vpack.c.b16 %v549, %v547
        %v578 = vpack.c.b16 %v550, %v548
        %v579 = vpack.c.b16 %v553, %v551
        %v580 = vpack.c.b16 %v554, %v552
        %v581 = vpack.c.b16 %v557, %v555
        %v582 = vpack.c.b16 %v558, %v556
        %v583 = vpack.c.b16 %v561, %v559
        %v584 = vpack.c.b16 %v562, %v560
        %v585 = vpack.c.b16 %v565, %v563
        %v586 = vpack.c.b16 %v566, %v564
        %v587 = vpack.c.b16 %v569, %v567
        %v588 = vpack.c.b16 %v570, %v568
        %v589 = vpack.c.b16 %v573, %v571
        %v590 = vpack.c.b16 %v574, %v572
        %607 = vmatprep.subr.bf16.mxu0 %v576
        %608 = vmatpush1.bf16.msra.mxu0 %v575
        %609 = vmatprep.subr.bf16.mxu0 %v578
        %610 = vmatpush1.bf16.msra.mxu0 %v577
        %611 = vmatprep.subr.bf16.mxu0 %v580
        %612 = vmatpush1.bf16.msra.mxu0 %v579
        %613 = vmatprep.subr.bf16.mxu0 %v582
        %614 = vmatpush1.bf16.msra.mxu0 %v581
        %615 = vmatprep.subr.bf16.mxu0 %v584
        %616 = vmatpush1.bf16.msra.mxu0 %v583
        %617 = vmatprep.subr.bf16.mxu0 %v586
        %618 = vmatpush1.bf16.msra.mxu0 %v585
        %619 = vmatprep.subr.bf16.mxu0 %v588
        %620 = vmatpush1.bf16.msra.mxu0 %v587
        %621 = vmatprep.subr.bf16.mxu0 %v590
        %622 = vmatpush1.bf16.msra.mxu0 %v589
        %623 = vmatprep.subr.bf16.mxu0 0
        %624 = vmatpush1.bf16.msra.mxu0 0
        %625 = vmatprep.subr.bf16.mxu0 0
        %626 = vmatpush1.bf16.msra.mxu0 0
        %627 = vmatprep.subr.bf16.mxu0 0
        %628 = vmatpush1.bf16.msra.mxu0 0
        %629 = vmatprep.subr.bf16.mxu0 0
        %630 = vmatpush1.bf16.msra.mxu0 0
        %631 = vmatprep.subr.bf16.mxu0 0
        %632 = vmatpush1.bf16.msra.mxu0 0
        %633 = vmatprep.subr.bf16.mxu0 0
        %634 = vmatpush1.bf16.msra.mxu0 0
        %635 = vmatprep.subr.bf16.mxu0 0
        %636 = vmatpush1.bf16.msra.mxu0 0
        %637 = vmatprep.subr.bf16.mxu0 0
        %638 = vmatpush1.bf16.msra.mxu0 0
        %639 = vmatprep.mubr.bf16.mxu0 0
        %640 = vmatmul.mubr.bf16.gmra.mrb[0].mxu0 %v495
        %v641 = vpop.f32.mrb[0].mxu0
        %v642 = vadd.f32 %v424, %v641
        %v643 = vpop.f32.mrb[0].mxu0
        %v644 = vadd.f32 %v428, %v643
        %v645 = vpop.f32.mrb[0].mxu0
        %v646 = vadd.f32 %v424, %v645
        %v647 = vpop.f32.mrb[0].mxu0
        %v648 = vadd.f32 %v428, %v647
        %649 = vmatprep.mubr.bf16.mxu0 0
        %650 = vmatmul.mubr.bf16.gmra.mrb[0].mxu0 %v496
        %v651 = vpop.f32.mrb[0].mxu0
        %v652 = vadd.f32 %v424, %v651
        %v653 = vpop.f32.mrb[0].mxu0
        %v654 = vadd.f32 %v428, %v653
        %v655 = vpop.f32.mrb[0].mxu0
        %v656 = vadd.f32 %v424, %v655
        %v657 = vpop.f32.mrb[0].mxu0
        %v658 = vadd.f32 %v428, %v657
        %659 = vmatprep.mubr.bf16.mxu0 0
        %660 = vmatmul.mubr.bf16.gmra.mrb[0].mxu0 %v497
        %v661 = vpop.f32.mrb[0].mxu0
        %v662 = vadd.f32 %v424, %v661
        %v663 = vpop.f32.mrb[0].mxu0
        %v664 = vadd.f32 %v428, %v663
        %v665 = vpop.f32.mrb[0].mxu0
        %v666 = vadd.f32 %v424, %v665
        %v667 = vpop.f32.mrb[0].mxu0
        %v668 = vadd.f32 %v428, %v667
        %669 = vmatprep.mubr.bf16.mxu0 0
        %670 = vmatmul.mubr.bf16.gmra.mrb[0].mxu0 %v498
        %v671 = vpop.f32.mrb[0].mxu0
        %v672 = vadd.f32 %v424, %v671
        %v673 = vpop.f32.mrb[0].mxu0
        %v674 = vadd.f32 %v428, %v673
        %v675 = vpop.f32.mrb[0].mxu0
        %v676 = vadd.f32 %v424, %v675
        %v677 = vpop.f32.mrb[0].mxu0
        %v678 = vadd.f32 %v428, %v677
        %679 = vmatprep.mubr.bf16.mxu0 0
        %680 = vmatmul.mubr.bf16.gmra.mrb[0].mxu0 %v499
        %v681 = vpop.f32.mrb[0].mxu0
        %v682 = vadd.f32 %v424, %v681
        %v683 = vpop.f32.mrb[0].mxu0
        %v684 = vadd.f32 %v428, %v683
        %v685 = vpop.f32.mrb[0].mxu0
        %v686 = vadd.f32 %v424, %v685
        %v687 = vpop.f32.mrb[0].mxu0
        %v688 = vadd.f32 %v428, %v687
        %689 = vmatprep.mubr.bf16.mxu0 0
        %690 = vmatmul.mubr.bf16.gmra.mrb[0].mxu0 %v500
        %v691 = vpop.f32.mrb[0].mxu0
        %v692 = vadd.f32 %v424, %v691
        %v693 = vpop.f32.mrb[0].mxu0
        %v694 = vadd.f32 %v428, %v693
        %v695 = vpop.f32.mrb[0].mxu0
        %v696 = vadd.f32 %v424, %v695
        %v697 = vpop.f32.mrb[0].mxu0
        %v698 = vadd.f32 %v428, %v697
        %699 = vmatprep.mubr.bf16.mxu0 0
        %700 = vmatmul.mubr.bf16.gmra.mrb[0].mxu0 %v501
        %v701 = vpop.f32.mrb[0].mxu0
        %v702 = vadd.f32 %v424, %v701
        %v703 = vpop.f32.mrb[0].mxu0
        %v704 = vadd.f32 %v428, %v703
        %v705 = vpop.f32.mrb[0].mxu0
        %v706 = vadd.f32 %v424, %v705
        %v707 = vpop.f32.mrb[0].mxu0
        %v708 = vadd.f32 %v428, %v707
        %709 = vmatprep.mubr.bf16.mxu0 0
        %710 = vmatmul.mubr.bf16.gmra.mrb[0].mxu0 %v502
        %v711 = vpop.f32.mrb[0].mxu0
        %v712 = vadd.f32 %v424, %v711
        %v713 = vpop.f32.mrb[0].mxu0
        %v714 = vadd.f32 %v428, %v713
        %v715 = vpop.f32.mrb[0].mxu0
        %v716 = vadd.f32 %v424, %v715
        %v717 = vpop.f32.mrb[0].mxu0
        %v718 = vadd.f32 %v428, %v717
        %719 = vmatprep.mubr.bf16.mxu0 0
        %720 = vmatmul.mubr.bf16.gmra.mrb[0].mxu0 %v503
        %v721 = vpop.f32.mrb[0].mxu0
        %v722 = vadd.f32 %v424, %v721
        %v723 = vpop.f32.mrb[0].mxu0
        %v724 = vadd.f32 %v428, %v723
        %v725 = vpop.f32.mrb[0].mxu0
        %v726 = vadd.f32 %v424, %v725
        %v727 = vpop.f32.mrb[0].mxu0
        %v728 = vadd.f32 %v428, %v727
        %729 = vmatprep.mubr.bf16.mxu0 0
        %730 = vmatmul.mubr.bf16.gmra.mrb[0].mxu0 %v504
        %v731 = vpop.f32.mrb[0].mxu0
        %v732 = vadd.f32 %v424, %v731
        %v733 = vpop.f32.mrb[0].mxu0
        %v734 = vadd.f32 %v428, %v733
        %v735 = vpop.f32.mrb[0].mxu0
        %v736 = vadd.f32 %v424, %v735
        %v737 = vpop.f32.mrb[0].mxu0
        %v738 = vadd.f32 %v428, %v737
        %739 = vmatprep.mubr.bf16.mxu0 0
        %740 = vmatmul.mubr.bf16.gmra.mrb[0].mxu0 %v505
        %v741 = vpop.f32.mrb[0].mxu0
        %v742 = vadd.f32 %v424, %v741
        %v743 = vpop.f32.mrb[0].mxu0
        %v744 = vadd.f32 %v428, %v743
        %v745 = vpop.f32.mrb[0].mxu0
        %v746 = vadd.f32 %v424, %v745
        %v747 = vpop.f32.mrb[0].mxu0
        %v748 = vadd.f32 %v428, %v747
        %749 = vmatprep.mubr.bf16.mxu0 0
        %750 = vmatmul.mubr.bf16.gmra.mrb[0].mxu0 %v506
        %v751 = vpop.f32.mrb[0].mxu0
        %v752 = vadd.f32 %v424, %v751
        %v753 = vpop.f32.mrb[0].mxu0
        %v754 = vadd.f32 %v428, %v753
        %v755 = vpop.f32.mrb[0].mxu0
        %v756 = vadd.f32 %v424, %v755
        %v757 = vpop.f32.mrb[0].mxu0
        %v758 = vadd.f32 %v428, %v757
        %759 = vmatprep.mubr.bf16.mxu0 0
        %760 = vmatmul.mubr.bf16.gmra.mrb[0].mxu0 %v507
        %v761 = vpop.f32.mrb[0].mxu0
        %v762 = vadd.f32 %v424, %v761
        %v763 = vpop.f32.mrb[0].mxu0
        %v764 = vadd.f32 %v428, %v763
        %v765 = vpop.f32.mrb[0].mxu0
        %v766 = vadd.f32 %v424, %v765
        %v767 = vpop.f32.mrb[0].mxu0
        %v768 = vadd.f32 %v428, %v767
        %769 = vmatprep.mubr.bf16.mxu0 0
        %770 = vmatmul.mubr.bf16.gmra.mrb[0].mxu0 %v508
        %v771 = vpop.f32.mrb[0].mxu0
        %v772 = vadd.f32 %v424, %v771
        %v773 = vpop.f32.mrb[0].mxu0
        %v774 = vadd.f32 %v428, %v773
        %v775 = vpop.f32.mrb[0].mxu0
        %v776 = vadd.f32 %v424, %v775
        %v777 = vpop.f32.mrb[0].mxu0
        %v778 = vadd.f32 %v428, %v777
        %779 = vmatprep.mubr.bf16.mxu0 0
        %780 = vmatmul.mubr.bf16.gmra.mrb[0].mxu0 %v509
        %v781 = vpop.f32.mrb[0].mxu0
        %v782 = vadd.f32 %v424, %v781
        %v783 = vpop.f32.mrb[0].mxu0
        %v784 = vadd.f32 %v428, %v783
        %v785 = vpop.f32.mrb[0].mxu0
        %v786 = vadd.f32 %v424, %v785
        %v787 = vpop.f32.mrb[0].mxu0
        %v788 = vadd.f32 %v428, %v787
        %789 = vmatprep.mubr.bf16.mxu0 0
        %790 = vmatmul.mubr.bf16.gmra.mrb[0].mxu0 %v510
        %v791 = vpop.f32.mrb[0].mxu0
        %v792 = vadd.f32 %v424, %v791
        %v793 = vpop.f32.mrb[0].mxu0
        %v794 = vadd.f32 %v428, %v793
        %v795 = vpop.f32.mrb[0].mxu0
        %v796 = vadd.f32 %v424, %v795
        %v797 = vpop.f32.mrb[0].mxu0
        %v798 = vadd.f32 %v428, %v797
        %799 = vdwg.mxu0
        %v800 = vpack.c.bf16 %v646, %v642
        %v801 = vpack.c.bf16 %v656, %v652
        %v802 = vpack.c.bf16 %v666, %v662
        %v803 = vpack.c.bf16 %v676, %v672
        %v804 = vpack.c.bf16 %v686, %v682
        %v805 = vpack.c.bf16 %v696, %v692
        %v806 = vpack.c.bf16 %v706, %v702
        %v807 = vpack.c.bf16 %v716, %v712
        %v808 = vpack.c.bf16 %v726, %v722
        %v809 = vpack.c.bf16 %v736, %v732
        %v810 = vpack.c.bf16 %v746, %v742
        %v811 = vpack.c.bf16 %v756, %v752
        %v812 = vpack.c.bf16 %v766, %v762
        %v813 = vpack.c.bf16 %v776, %v772
        %v814 = vpack.c.bf16 %v786, %v782
        %v815 = vpack.c.bf16 %v796, %v792
        %v832 = vunpack.c.l.b16 %v800
        %v833 = vunpack.c.h.b16 %v800
        %v834 = vunpack.c.l.b16 %v801
        %v835 = vunpack.c.h.b16 %v801
        %v836 = vunpack.c.l.b16 %v802
        %v837 = vunpack.c.h.b16 %v802
        %v838 = vunpack.c.l.b16 %v803
        %v839 = vunpack.c.h.b16 %v803
        %v840 = vunpack.c.l.b16 %v804
        %v841 = vunpack.c.h.b16 %v804
        %v842 = vunpack.c.l.b16 %v805
        %v843 = vunpack.c.h.b16 %v805
        %v844 = vunpack.c.l.b16 %v806
        %v845 = vunpack.c.h.b16 %v806
        %v846 = vunpack.c.l.b16 %v807
        %v847 = vunpack.c.h.b16 %v807
        %v848 = vunpack.c.l.b16 %v808
        %v849 = vunpack.c.h.b16 %v808
        %v850 = vunpack.c.l.b16 %v809
        %v851 = vunpack.c.h.b16 %v809
        %v852 = vunpack.c.l.b16 %v810
        %v853 = vunpack.c.h.b16 %v810
        %v854 = vunpack.c.l.b16 %v811
        %v855 = vunpack.c.h.b16 %v811
        %v856 = vunpack.c.l.b16 %v812
        %v857 = vunpack.c.h.b16 %v812
        %v858 = vunpack.c.l.b16 %v813
        %v859 = vunpack.c.h.b16 %v813
        %v860 = vunpack.c.l.b16 %v814
        %v861 = vunpack.c.h.b16 %v814
        %v862 = vunpack.c.l.b16 %v815
        %v863 = vunpack.c.h.b16 %v815
        %v864 = vpack.c.b16 %v832, %v832
        %v865 = vpack.c.b16 %v833, %v833
        %v866 = vpack.c.b16 %v834, %v834
        %v867 = vpack.c.b16 %v835, %v835
        %v868 = vpack.c.b16 %v836, %v836
        %v869 = vpack.c.b16 %v837, %v837
        %v870 = vpack.c.b16 %v838, %v838
        %v871 = vpack.c.b16 %v839, %v839
        %v872 = vpack.c.b16 %v840, %v840
        %v873 = vpack.c.b16 %v841, %v841
        %v874 = vpack.c.b16 %v842, %v842
        %v875 = vpack.c.b16 %v843, %v843
        %v876 = vpack.c.b16 %v844, %v844
        %v877 = vpack.c.b16 %v845, %v845
        %v878 = vpack.c.b16 %v846, %v846
        %v879 = vpack.c.b16 %v847, %v847
        %v880 = vpack.c.b16 %v848, %v848
        %v881 = vpack.c.b16 %v849, %v849
        %v882 = vpack.c.b16 %v850, %v850
        %v883 = vpack.c.b16 %v851, %v851
        %v884 = vpack.c.b16 %v852, %v852
        %v885 = vpack.c.b16 %v853, %v853
        %v886 = vpack.c.b16 %v854, %v854
        %v887 = vpack.c.b16 %v855, %v855
        %v888 = vpack.c.b16 %v856, %v856
        %v889 = vpack.c.b16 %v857, %v857
        %v890 = vpack.c.b16 %v858, %v858
        %v891 = vpack.c.b16 %v859, %v859
        %v892 = vpack.c.b16 %v860, %v860
        %v893 = vpack.c.b16 %v861, %v861
        %v894 = vpack.c.b16 %v862, %v862
        %v895 = vpack.c.b16 %v863, %v863
        %928 = vst [vmem:[%s351] sm:$0xf] %v864
        %929 = vst [vmem:[%s351 + $0x4] sm:$0xf] %v865
        %930 = vst [vmem:[%s351 + $0x8] sm:$0xf] %v866
        %931 = vst [vmem:[%s351 + $0xc] sm:$0xf] %v867
        %932 = vst [vmem:[%s351 + $0x10] sm:$0xf] %v868
        %933 = vst [vmem:[%s351 + $0x14] sm:$0xf] %v869
        %934 = vst [vmem:[%s351 + $0x18] sm:$0xf] %v870
        %935 = vst [vmem:[%s351 + $0x1c] sm:$0xf] %v871
        %936 = vst [vmem:[%s351 + $0x20] sm:$0xf] %v872
        %937 = vst [vmem:[%s351 + $0x24] sm:$0xf] %v873
        %938 = vst [vmem:[%s351 + $0x28] sm:$0xf] %v874
        %939 = vst [vmem:[%s351 + $0x2c] sm:$0xf] %v875
        %940 = vst [vmem:[%s351 + $0x30] sm:$0xf] %v876
        %941 = vst [vmem:[%s351 + $0x34] sm:$0xf] %v877
        %942 = vst [vmem:[%s351 + $0x38] sm:$0xf] %v878
        %943 = vst [vmem:[%s351 + $0x3c] sm:$0xf] %v879
        %944 = vst [vmem:[%s351 + $0x40] sm:$0xf] %v880
        %945 = vst [vmem:[%s351 + $0x44] sm:$0xf] %v881
        %946 = vst [vmem:[%s351 + $0x48] sm:$0xf] %v882
        %947 = vst [vmem:[%s351 + $0x4c] sm:$0xf] %v883
        %948 = vst [vmem:[%s351 + $0x50] sm:$0xf] %v884
        %949 = vst [vmem:[%s351 + $0x54] sm:$0xf] %v885
        %950 = vst [vmem:[%s351 + $0x58] sm:$0xf] %v886
        %951 = vst [vmem:[%s351 + $0x5c] sm:$0xf] %v887
        %952 = vst [vmem:[%s351 + $0x60] sm:$0xf] %v888
        %953 = vst [vmem:[%s351 + $0x64] sm:$0xf] %v889
        %954 = vst [vmem:[%s351 + $0x68] sm:$0xf] %v890
        %955 = vst [vmem:[%s351 + $0x6c] sm:$0xf] %v891
        %956 = vst [vmem:[%s351 + $0x70] sm:$0xf] %v892
        %957 = vst [vmem:[%s351 + $0x74] sm:$0xf] %v893
        %958 = vst [vmem:[%s351 + $0x78] sm:$0xf] %v894
        %959 = vst [vmem:[%s351 + $0x7c] sm:$0xf] %v895
        %v960 = vpack.c.bf16 %v648, %v644
        %v961 = vpack.c.bf16 %v658, %v654
        %v962 = vpack.c.bf16 %v668, %v664
        %v963 = vpack.c.bf16 %v678, %v674
        %v964 = vpack.c.bf16 %v688, %v684
        %v965 = vpack.c.bf16 %v698, %v694
        %v966 = vpack.c.bf16 %v708, %v704
        %v967 = vpack.c.bf16 %v718, %v714
        %v968 = vpack.c.bf16 %v728, %v724
        %v969 = vpack.c.bf16 %v738, %v734
        %v970 = vpack.c.bf16 %v748, %v744
        %v971 = vpack.c.bf16 %v758, %v754
        %v972 = vpack.c.bf16 %v768, %v764
        %v973 = vpack.c.bf16 %v778, %v774
        %v974 = vpack.c.bf16 %v788, %v784
        %v975 = vpack.c.bf16 %v798, %v794
        %v992 = vunpack.c.l.b16 %v960
        %v993 = vunpack.c.h.b16 %v960
        %v994 = vunpack.c.l.b16 %v961
        %v995 = vunpack.c.h.b16 %v961
        %v996 = vunpack.c.l.b16 %v962
        %v997 = vunpack.c.h.b16 %v962
        %v998 = vunpack.c.l.b16 %v963
        %v999 = vunpack.c.h.b16 %v963
        %v1000 = vunpack.c.l.b16 %v964
        %v1001 = vunpack.c.h.b16 %v964
        %v1002 = vunpack.c.l.b16 %v965
        %v1003 = vunpack.c.h.b16 %v965
        %v1004 = vunpack.c.l.b16 %v966
        %v1005 = vunpack.c.h.b16 %v966
        %v1006 = vunpack.c.l.b16 %v967
        %v1007 = vunpack.c.h.b16 %v967
        %v1008 = vunpack.c.l.b16 %v968
        %v1009 = vunpack.c.h.b16 %v968
        %v1010 = vunpack.c.l.b16 %v969
        %v1011 = vunpack.c.h.b16 %v969
        %v1012 = vunpack.c.l.b16 %v970
        %v1013 = vunpack.c.h.b16 %v970
        %v1014 = vunpack.c.l.b16 %v971
        %v1015 = vunpack.c.h.b16 %v971
        %v1016 = vunpack.c.l.b16 %v972
        %v1017 = vunpack.c.h.b16 %v972
        %v1018 = vunpack.c.l.b16 %v973
        %v1019 = vunpack.c.h.b16 %v973
        %v1020 = vunpack.c.l.b16 %v974
        %v1021 = vunpack.c.h.b16 %v974
        %v1022 = vunpack.c.l.b16 %v975
        %v1023 = vunpack.c.h.b16 %v975
        %v1024 = vpack.c.b16 %v992, %v992
        %v1025 = vpack.c.b16 %v993, %v993
        %v1026 = vpack.c.b16 %v994, %v994
        %v1027 = vpack.c.b16 %v995, %v995
        %v1028 = vpack.c.b16 %v996, %v996
        %v1029 = vpack.c.b16 %v997, %v997
        %v1030 = vpack.c.b16 %v998, %v998
        %v1031 = vpack.c.b16 %v999, %v999
        %v1032 = vpack.c.b16 %v1000, %v1000
        %v1033 = vpack.c.b16 %v1001, %v1001
        %v1034 = vpack.c.b16 %v1002, %v1002
        %v1035 = vpack.c.b16 %v1003, %v1003
        %v1036 = vpack.c.b16 %v1004, %v1004
        %v1037 = vpack.c.b16 %v1005, %v1005
        %v1038 = vpack.c.b16 %v1006, %v1006
        %v1039 = vpack.c.b16 %v1007, %v1007
        %v1040 = vpack.c.b16 %v1008, %v1008
        %v1041 = vpack.c.b16 %v1009, %v1009
        %v1042 = vpack.c.b16 %v1010, %v1010
        %v1043 = vpack.c.b16 %v1011, %v1011
        %v1044 = vpack.c.b16 %v1012, %v1012
        %v1045 = vpack.c.b16 %v1013, %v1013
        %v1046 = vpack.c.b16 %v1014, %v1014
        %v1047 = vpack.c.b16 %v1015, %v1015
        %v1048 = vpack.c.b16 %v1016, %v1016
        %v1049 = vpack.c.b16 %v1017, %v1017
        %v1050 = vpack.c.b16 %v1018, %v1018
        %v1051 = vpack.c.b16 %v1019, %v1019
        %v1052 = vpack.c.b16 %v1020, %v1020
        %v1053 = vpack.c.b16 %v1021, %v1021
        %v1054 = vpack.c.b16 %v1022, %v1022
        %v1055 = vpack.c.b16 %v1023, %v1023
        %1088 = vst [vmem:[%s358] sm:$0xf] %v1024
        %1089 = vst [vmem:[%s358 + $0x4] sm:$0xf] %v1025
        %1090 = vst [vmem:[%s358 + $0x8] sm:$0xf] %v1026
        %1091 = vst [vmem:[%s358 + $0xc] sm:$0xf] %v1027
        %1092 = vst [vmem:[%s358 + $0x10] sm:$0xf] %v1028
        %1093 = vst [vmem:[%s358 + $0x14] sm:$0xf] %v1029
        %1094 = vst [vmem:[%s358 + $0x18] sm:$0xf] %v1030
        %1095 = vst [vmem:[%s358 + $0x1c] sm:$0xf] %v1031
        %1096 = vst [vmem:[%s358 + $0x20] sm:$0xf] %v1032
        %1097 = vst [vmem:[%s358 + $0x24] sm:$0xf] %v1033
        %1098 = vst [vmem:[%s358 + $0x28] sm:$0xf] %v1034
        %1099 = vst [vmem:[%s358 + $0x2c] sm:$0xf] %v1035
        %1100 = vst [vmem:[%s358 + $0x30] sm:$0xf] %v1036
        %1101 = vst [vmem:[%s358 + $0x34] sm:$0xf] %v1037
        %1102 = vst [vmem:[%s358 + $0x38] sm:$0xf] %v1038
        %1103 = vst [vmem:[%s358 + $0x3c] sm:$0xf] %v1039
        %1104 = vst [vmem:[%s358 + $0x40] sm:$0xf] %v1040
        %1105 = vst [vmem:[%s358 + $0x44] sm:$0xf] %v1041
        %1106 = vst [vmem:[%s358 + $0x48] sm:$0xf] %v1042
        %1107 = vst [vmem:[%s358 + $0x4c] sm:$0xf] %v1043
        %1108 = vst [vmem:[%s358 + $0x50] sm:$0xf] %v1044
        %1109 = vst [vmem:[%s358 + $0x54] sm:$0xf] %v1045
        %1110 = vst [vmem:[%s358 + $0x58] sm:$0xf] %v1046
        %1111 = vst [vmem:[%s358 + $0x5c] sm:$0xf] %v1047
        %1112 = vst [vmem:[%s358 + $0x60] sm:$0xf] %v1048
        %1113 = vst [vmem:[%s358 + $0x64] sm:$0xf] %v1049
        %1114 = vst [vmem:[%s358 + $0x68] sm:$0xf] %v1050
        %1115 = vst [vmem:[%s358 + $0x6c] sm:$0xf] %v1051
        %1116 = vst [vmem:[%s358 + $0x70] sm:$0xf] %v1052
        %1117 = vst [vmem:[%s358 + $0x74] sm:$0xf] %v1053
        %1118 = vst [vmem:[%s358 + $0x78] sm:$0xf] %v1054
        %1119 = vst [vmem:[%s358 + $0x7c] sm:$0xf] %v1055
        %v1120 = vld [vmem:[#allocation7] sm:$0xf]
        %v1121 = vld [vmem:[#allocation7 + $0x4] sm:$0xf]
        %v1122 = vld [vmem:[#allocation7 + $0x8] sm:$0xf]
        %v1123 = vld [vmem:[#allocation7 + $0xc] sm:$0xf]
        %v1124 = vld [vmem:[#allocation7 + $0x10] sm:$0xf]
        %v1125 = vld [vmem:[#allocation7 + $0x14] sm:$0xf]
        %v1126 = vld [vmem:[#allocation7 + $0x18] sm:$0xf]
        %v1127 = vld [vmem:[#allocation7 + $0x1c] sm:$0xf]
        %v1128 = vld [vmem:[#allocation7 + $0x20] sm:$0xf]
        %v1129 = vld [vmem:[#allocation7 + $0x24] sm:$0xf]
        %v1130 = vld [vmem:[#allocation7 + $0x28] sm:$0xf]
        %v1131 = vld [vmem:[#allocation7 + $0x2c] sm:$0xf]
        %v1132 = vld [vmem:[#allocation7 + $0x30] sm:$0xf]
        %v1133 = vld [vmem:[#allocation7 + $0x34] sm:$0xf]
        %v1134 = vld [vmem:[#allocation7 + $0x38] sm:$0xf]
        %v1135 = vld [vmem:[#allocation7 + $0x3c] sm:$0xf]
        %v1136 = vld [vmem:[%s4] sm:$0x1]
        %v1138 = vlaneseq
        %v1139 = vshrl.u32 %v1138, 7
        %v1140 = vsub.s32 0, %v1139
        %v1141 = vrot.slane %v1136, %v1140
        %v1159 = vunpack.c.l.b16 %v1120
        %v1160 = vunpack.c.l.b16 %v1121
        %v1161 = vunpack.c.l.b16 %v1122
        %v1162 = vunpack.c.l.b16 %v1123
        %v1163 = vunpack.c.l.b16 %v1124
        %v1164 = vunpack.c.l.b16 %v1125
        %v1165 = vunpack.c.l.b16 %v1126
        %v1166 = vunpack.c.l.b16 %v1127
        %v1167 = vunpack.c.l.b16 %v1128
        %v1168 = vunpack.c.l.b16 %v1129
        %v1169 = vunpack.c.l.b16 %v1130
        %v1170 = vunpack.c.l.b16 %v1131
        %v1171 = vunpack.c.l.b16 %v1132
        %v1172 = vunpack.c.l.b16 %v1133
        %v1173 = vunpack.c.l.b16 %v1134
        %v1174 = vunpack.c.l.b16 %v1135
        %v1175 = vpack.c.b16 %v1160, %v1159
        %v1176 = vpack.c.b16 %v1162, %v1161
        %v1177 = vpack.c.b16 %v1164, %v1163
        %v1178 = vpack.c.b16 %v1166, %v1165
        %v1179 = vpack.c.b16 %v1168, %v1167
        %v1180 = vpack.c.b16 %v1170, %v1169
        %v1181 = vpack.c.b16 %v1172, %v1171
        %v1182 = vpack.c.b16 %v1174, %v1173
        %1191 = vmatprep.subr.bf16.mxu0 0
        %1192 = vmatpush1.bf16.msra.mxu0 %v1175
        %1193 = vmatprep.subr.bf16.mxu0 0
        %1194 = vmatpush1.bf16.msra.mxu0 %v1176
        %1195 = vmatprep.subr.bf16.mxu0 0
        %1196 = vmatpush1.bf16.msra.mxu0 %v1177
        %1197 = vmatprep.subr.bf16.mxu0 0
        %1198 = vmatpush1.bf16.msra.mxu0 %v1178
        %1199 = vmatprep.subr.bf16.mxu0 0
        %1200 = vmatpush1.bf16.msra.mxu0 %v1179
        %1201 = vmatprep.subr.bf16.mxu0 0
        %1202 = vmatpush1.bf16.msra.mxu0 %v1180
        %1203 = vmatprep.subr.bf16.mxu0 0
        %1204 = vmatpush1.bf16.msra.mxu0 %v1181
        %1205 = vmatprep.subr.bf16.mxu0 0
        %1206 = vmatpush1.bf16.msra.mxu0 %v1182
        %1207 = vmatprep.subr.bf16.mxu0 0
        %1208 = vmatpush1.bf16.msra.mxu0 0
        %1209 = vmatprep.subr.bf16.mxu0 0
        %1210 = vmatpush1.bf16.msra.mxu0 0
        %1211 = vmatprep.subr.bf16.mxu0 0
        %1212 = vmatpush1.bf16.msra.mxu0 0
        %1213 = vmatprep.subr.bf16.mxu0 0
        %1214 = vmatpush1.bf16.msra.mxu0 0
        %1215 = vmatprep.subr.bf16.mxu0 0
        %1216 = vmatpush1.bf16.msra.mxu0 0
        %1217 = vmatprep.subr.bf16.mxu0 0
        %1218 = vmatpush1.bf16.msra.mxu0 0
        %1219 = vmatprep.subr.bf16.mxu0 0
        %1220 = vmatpush1.bf16.msra.mxu0 0
        %1221 = vmatprep.subr.bf16.mxu0 0
        %1222 = vmatpush1.bf16.msra.mxu0 0
        %1223 = vmatprep.mubr.bf16.mxu0 0
        %1224 = vmatmul.mubr.bf16.gmra.mrb[0].mxu0 %v495
        %v1225 = vpop.f32.mrb[0].mxu0
        %v1226 = vadd.f32 %v1141, %v1225
        %v1227 = vpop.f32.mrb[0].mxu0
        %v1228 = vpop.f32.mrb[0].mxu0
        %v1229 = vadd.f32 %v1141, %v1228
        %v1230 = vpop.f32.mrb[0].mxu0
        %1231 = vmatprep.mubr.bf16.mxu0 0
        %1232 = vmatmul.mubr.bf16.gmra.mrb[0].mxu0 %v496
        %v1233 = vpop.f32.mrb[0].mxu0
        %v1234 = vadd.f32 %v1141, %v1233
        %v1235 = vpop.f32.mrb[0].mxu0
        %v1236 = vpop.f32.mrb[0].mxu0
        %v1237 = vadd.f32 %v1141, %v1236
        %v1238 = vpop.f32.mrb[0].mxu0
        %1239 = vmatprep.mubr.bf16.mxu0 0
        %1240 = vmatmul.mubr.bf16.gmra.mrb[0].mxu0 %v497
        %v1241 = vpop.f32.mrb[0].mxu0
        %v1242 = vadd.f32 %v1141, %v1241
        %v1243 = vpop.f32.mrb[0].mxu0
        %v1244 = vpop.f32.mrb[0].mxu0
        %v1245 = vadd.f32 %v1141, %v1244
        %v1246 = vpop.f32.mrb[0].mxu0
        %1247 = vmatprep.mubr.bf16.mxu0 0
        %1248 = vmatmul.mubr.bf16.gmra.mrb[0].mxu0 %v498
        %v1249 = vpop.f32.mrb[0].mxu0
        %v1250 = vadd.f32 %v1141, %v1249
        %v1251 = vpop.f32.mrb[0].mxu0
        %v1252 = vpop.f32.mrb[0].mxu0
        %v1253 = vadd.f32 %v1141, %v1252
        %v1254 = vpop.f32.mrb[0].mxu0
        %1255 = vmatprep.mubr.bf16.mxu0 0
        %1256 = vmatmul.mubr.bf16.gmra.mrb[0].mxu0 %v499
        %v1257 = vpop.f32.mrb[0].mxu0
        %v1258 = vadd.f32 %v1141, %v1257
        %v1259 = vpop.f32.mrb[0].mxu0
        %v1260 = vpop.f32.mrb[0].mxu0
        %v1261 = vadd.f32 %v1141, %v1260
        %v1262 = vpop.f32.mrb[0].mxu0
        %1263 = vmatprep.mubr.bf16.mxu0 0
        %1264 = vmatmul.mubr.bf16.gmra.mrb[0].mxu0 %v500
        %v1265 = vpop.f32.mrb[0].mxu0
        %v1266 = vadd.f32 %v1141, %v1265
        %v1267 = vpop.f32.mrb[0].mxu0
        %v1268 = vpop.f32.mrb[0].mxu0
        %v1269 = vadd.f32 %v1141, %v1268
        %v1270 = vpop.f32.mrb[0].mxu0
        %1271 = vmatprep.mubr.bf16.mxu0 0
        %1272 = vmatmul.mubr.bf16.gmra.mrb[0].mxu0 %v501
        %v1273 = vpop.f32.mrb[0].mxu0
        %v1274 = vadd.f32 %v1141, %v1273
        %v1275 = vpop.f32.mrb[0].mxu0
        %v1276 = vpop.f32.mrb[0].mxu0
        %v1277 = vadd.f32 %v1141, %v1276
        %v1278 = vpop.f32.mrb[0].mxu0
        %1279 = vmatprep.mubr.bf16.mxu0 0
        %1280 = vmatmul.mubr.bf16.gmra.mrb[0].mxu0 %v502
        %v1281 = vpop.f32.mrb[0].mxu0
        %v1282 = vadd.f32 %v1141, %v1281
        %v1283 = vpop.f32.mrb[0].mxu0
        %v1284 = vpop.f32.mrb[0].mxu0
        %v1285 = vadd.f32 %v1141, %v1284
        %v1286 = vpop.f32.mrb[0].mxu0
        %1287 = vmatprep.mubr.bf16.mxu0 0
        %1288 = vmatmul.mubr.bf16.gmra.mrb[0].mxu0 %v503
        %v1289 = vpop.f32.mrb[0].mxu0
        %v1290 = vadd.f32 %v1141, %v1289
        %v1291 = vpop.f32.mrb[0].mxu0
        %v1292 = vpop.f32.mrb[0].mxu0
        %v1293 = vadd.f32 %v1141, %v1292
        %v1294 = vpop.f32.mrb[0].mxu0
        %1295 = vmatprep.mubr.bf16.mxu0 0
        %1296 = vmatmul.mubr.bf16.gmra.mrb[0].mxu0 %v504
        %v1297 = vpop.f32.mrb[0].mxu0
        %v1298 = vadd.f32 %v1141, %v1297
        %v1299 = vpop.f32.mrb[0].mxu0
        %v1300 = vpop.f32.mrb[0].mxu0
        %v1301 = vadd.f32 %v1141, %v1300
        %v1302 = vpop.f32.mrb[0].mxu0
        %1303 = vmatprep.mubr.bf16.mxu0 0
        %1304 = vmatmul.mubr.bf16.gmra.mrb[0].mxu0 %v505
        %v1305 = vpop.f32.mrb[0].mxu0
        %v1306 = vadd.f32 %v1141, %v1305
        %v1307 = vpop.f32.mrb[0].mxu0
        %v1308 = vpop.f32.mrb[0].mxu0
        %v1309 = vadd.f32 %v1141, %v1308
        %v1310 = vpop.f32.mrb[0].mxu0
        %1311 = vmatprep.mubr.bf16.mxu0 0
        %1312 = vmatmul.mubr.bf16.gmra.mrb[0].mxu0 %v506
        %v1313 = vpop.f32.mrb[0].mxu0
        %v1314 = vadd.f32 %v1141, %v1313
        %v1315 = vpop.f32.mrb[0].mxu0
        %v1316 = vpop.f32.mrb[0].mxu0
        %v1317 = vadd.f32 %v1141, %v1316
        %v1318 = vpop.f32.mrb[0].mxu0
        %1319 = vmatprep.mubr.bf16.mxu0 0
        %1320 = vmatmul.mubr.bf16.gmra.mrb[0].mxu0 %v507
        %v1321 = vpop.f32.mrb[0].mxu0
        %v1322 = vadd.f32 %v1141, %v1321
        %v1323 = vpop.f32.mrb[0].mxu0
        %v1324 = vpop.f32.mrb[0].mxu0
        %v1325 = vadd.f32 %v1141, %v1324
        %v1326 = vpop.f32.mrb[0].mxu0
        %1327 = vmatprep.mubr.bf16.mxu0 0
        %1328 = vmatmul.mubr.bf16.gmra.mrb[0].mxu0 %v508
        %v1329 = vpop.f32.mrb[0].mxu0
        %v1330 = vadd.f32 %v1141, %v1329
        %v1331 = vpop.f32.mrb[0].mxu0
        %v1332 = vpop.f32.mrb[0].mxu0
        %v1333 = vadd.f32 %v1141, %v1332
        %v1334 = vpop.f32.mrb[0].mxu0
        %1335 = vmatprep.mubr.bf16.mxu0 0
        %1336 = vmatmul.mubr.bf16.gmra.mrb[0].mxu0 %v509
        %v1337 = vpop.f32.mrb[0].mxu0
        %v1338 = vadd.f32 %v1141, %v1337
        %v1339 = vpop.f32.mrb[0].mxu0
        %v1340 = vpop.f32.mrb[0].mxu0
        %v1341 = vadd.f32 %v1141, %v1340
        %v1342 = vpop.f32.mrb[0].mxu0
        %1343 = vmatprep.mubr.bf16.mxu0 0
        %1344 = vmatmul.mubr.bf16.gmra.mrb[0].mxu0 %v510
        %v1345 = vpop.f32.mrb[0].mxu0
        %v1346 = vadd.f32 %v1141, %v1345
        %v1347 = vpop.f32.mrb[0].mxu0
        %v1348 = vpop.f32.mrb[0].mxu0
        %v1349 = vadd.f32 %v1141, %v1348
        %v1350 = vpop.f32.mrb[0].mxu0
        %1351 = vdwg.mxu0
        %v1352 = vpack.c.bf16 %v1229, %v1226
        %v1353 = vpack.c.bf16 %v1237, %v1234
        %v1354 = vpack.c.bf16 %v1245, %v1242
        %v1355 = vpack.c.bf16 %v1253, %v1250
        %v1356 = vpack.c.bf16 %v1261, %v1258
        %v1357 = vpack.c.bf16 %v1269, %v1266
        %v1358 = vpack.c.bf16 %v1277, %v1274
        %v1359 = vpack.c.bf16 %v1285, %v1282
        %v1360 = vpack.c.bf16 %v1293, %v1290
        %v1361 = vpack.c.bf16 %v1301, %v1298
        %v1362 = vpack.c.bf16 %v1309, %v1306
        %v1363 = vpack.c.bf16 %v1317, %v1314
        %v1364 = vpack.c.bf16 %v1325, %v1322
        %v1365 = vpack.c.bf16 %v1333, %v1330
        %v1366 = vpack.c.bf16 %v1341, %v1338
        %v1367 = vpack.c.bf16 %v1349, %v1346
        %v1384 = vunpack.c.l.b16 %v1352
        %v1385 = vunpack.c.h.b16 %v1352
        %v1386 = vunpack.c.l.b16 %v1353
        %v1387 = vunpack.c.h.b16 %v1353
        %v1388 = vunpack.c.l.b16 %v1354
        %v1389 = vunpack.c.h.b16 %v1354
        %v1390 = vunpack.c.l.b16 %v1355
        %v1391 = vunpack.c.h.b16 %v1355
        %v1392 = vunpack.c.l.b16 %v1356
        %v1393 = vunpack.c.h.b16 %v1356
        %v1394 = vunpack.c.l.b16 %v1357
        %v1395 = vunpack.c.h.b16 %v1357
        %v1396 = vunpack.c.l.b16 %v1358
        %v1397 = vunpack.c.h.b16 %v1358
        %v1398 = vunpack.c.l.b16 %v1359
        %v1399 = vunpack.c.h.b16 %v1359
        %v1400 = vunpack.c.l.b16 %v1360
        %v1401 = vunpack.c.h.b16 %v1360
        %v1402 = vunpack.c.l.b16 %v1361
        %v1403 = vunpack.c.h.b16 %v1361
        %v1404 = vunpack.c.l.b16 %v1362
        %v1405 = vunpack.c.h.b16 %v1362
        %v1406 = vunpack.c.l.b16 %v1363
        %v1407 = vunpack.c.h.b16 %v1363
        %v1408 = vunpack.c.l.b16 %v1364
        %v1409 = vunpack.c.h.b16 %v1364
        %v1410 = vunpack.c.l.b16 %v1365
        %v1411 = vunpack.c.h.b16 %v1365
        %v1412 = vunpack.c.l.b16 %v1366
        %v1413 = vunpack.c.h.b16 %v1366
        %v1414 = vunpack.c.l.b16 %v1367
        %v1415 = vunpack.c.h.b16 %v1367
        %v1416 = vpack.c.b16 %v1384, %v1384
        %v1417 = vpack.c.b16 %v1385, %v1385
        %v1418 = vpack.c.b16 %v1386, %v1386
        %v1419 = vpack.c.b16 %v1387, %v1387
        %v1420 = vpack.c.b16 %v1388, %v1388
        %v1421 = vpack.c.b16 %v1389, %v1389
        %v1422 = vpack.c.b16 %v1390, %v1390
        %v1423 = vpack.c.b16 %v1391, %v1391
        %v1424 = vpack.c.b16 %v1392, %v1392
        %v1425 = vpack.c.b16 %v1393, %v1393
        %v1426 = vpack.c.b16 %v1394, %v1394
        %v1427 = vpack.c.b16 %v1395, %v1395
        %v1428 = vpack.c.b16 %v1396, %v1396
        %v1429 = vpack.c.b16 %v1397, %v1397
        %v1430 = vpack.c.b16 %v1398, %v1398
        %v1431 = vpack.c.b16 %v1399, %v1399
        %v1432 = vpack.c.b16 %v1400, %v1400
        %v1433 = vpack.c.b16 %v1401, %v1401
        %v1434 = vpack.c.b16 %v1402, %v1402
        %v1435 = vpack.c.b16 %v1403, %v1403
        %v1436 = vpack.c.b16 %v1404, %v1404
        %v1437 = vpack.c.b16 %v1405, %v1405
        %v1438 = vpack.c.b16 %v1406, %v1406
        %v1439 = vpack.c.b16 %v1407, %v1407
        %v1440 = vpack.c.b16 %v1408, %v1408
        %v1441 = vpack.c.b16 %v1409, %v1409
        %v1442 = vpack.c.b16 %v1410, %v1410
        %v1443 = vpack.c.b16 %v1411, %v1411
        %v1444 = vpack.c.b16 %v1412, %v1412
        %v1445 = vpack.c.b16 %v1413, %v1413
        %v1446 = vpack.c.b16 %v1414, %v1414
        %v1447 = vpack.c.b16 %v1415, %v1415
        %1480 = vst [vmem:[%s365] sm:$0xf] %v1416
        %1481 = vst [vmem:[%s365 + $0x4] sm:$0xf] %v1417
        %1482 = vst [vmem:[%s365 + $0x8] sm:$0xf] %v1418
        %1483 = vst [vmem:[%s365 + $0xc] sm:$0xf] %v1419
        %1484 = vst [vmem:[%s365 + $0x10] sm:$0xf] %v1420
        %1485 = vst [vmem:[%s365 + $0x14] sm:$0xf] %v1421
        %1486 = vst [vmem:[%s365 + $0x18] sm:$0xf] %v1422
        %1487 = vst [vmem:[%s365 + $0x1c] sm:$0xf] %v1423
        %1488 = vst [vmem:[%s365 + $0x20] sm:$0xf] %v1424
        %1489 = vst [vmem:[%s365 + $0x24] sm:$0xf] %v1425
        %1490 = vst [vmem:[%s365 + $0x28] sm:$0xf] %v1426
        %1491 = vst [vmem:[%s365 + $0x2c] sm:$0xf] %v1427
        %1492 = vst [vmem:[%s365 + $0x30] sm:$0xf] %v1428
        %1493 = vst [vmem:[%s365 + $0x34] sm:$0xf] %v1429
        %1494 = vst [vmem:[%s365 + $0x38] sm:$0xf] %v1430
        %1495 = vst [vmem:[%s365 + $0x3c] sm:$0xf] %v1431
        %1496 = vst [vmem:[%s365 + $0x40] sm:$0xf] %v1432
        %1497 = vst [vmem:[%s365 + $0x44] sm:$0xf] %v1433
        %1498 = vst [vmem:[%s365 + $0x48] sm:$0xf] %v1434
        %1499 = vst [vmem:[%s365 + $0x4c] sm:$0xf] %v1435
        %1500 = vst [vmem:[%s365 + $0x50] sm:$0xf] %v1436
        %1501 = vst [vmem:[%s365 + $0x54] sm:$0xf] %v1437
        %1502 = vst [vmem:[%s365 + $0x58] sm:$0xf] %v1438
        %1503 = vst [vmem:[%s365 + $0x5c] sm:$0xf] %v1439
        %1504 = vst [vmem:[%s365 + $0x60] sm:$0xf] %v1440
        %1505 = vst [vmem:[%s365 + $0x64] sm:$0xf] %v1441
        %1506 = vst [vmem:[%s365 + $0x68] sm:$0xf] %v1442
        %1507 = vst [vmem:[%s365 + $0x6c] sm:$0xf] %v1443
        %1508 = vst [vmem:[%s365 + $0x70] sm:$0xf] %v1444
        %1509 = vst [vmem:[%s365 + $0x74] sm:$0xf] %v1445
        %1510 = vst [vmem:[%s365 + $0x78] sm:$0xf] %v1446
        %1511 = vst [vmem:[%s365 + $0x7c] sm:$0xf] %v1447
        %s1512 = sand.u32 %s163, 1
        %s1513 = scalar_lea.sflag [#allocation4], %s1512
        %s1514 = sand.u32 %s163, 1
        %s1515 = smul.addr %s1514, 128
        %s1516 = scalar_lea.vmem [#allocation8], %s1515
        %s1517 = sand.u32 %s29, 1
        %s1518 = scalar_lea.sflag [#allocation10], %s1517
        %s1519 = sand.u32 %s191, 1
        %s1520 = smul.addr %s1519, 128
        %s1521 = scalar_lea.vmem [#allocation9], %s1520
        %s1522 = sand.u32 %s29, 1
        %s1523 = scalar_lea.sflag [#allocation10], %s1522
        %s1524 = sand.u32 %s219, 1
        %s1525 = smul.addr %s1524, 128
        %s1526 = scalar_lea.vmem [#allocation11], %s1525
        // Predicated region
        $region53: #{tpu_custom_call.1} parent=39 // pred_check
          %p1527 = pneg %p173
        $region54: #{tpu_custom_call.1} parent=39 // pred_check_branch
          %1529 = sbr.rel (%p1527) target = $region56
        $region55: #{tpu_custom_call.1} parent=39 // pred_region
          %s1530 = smul.u32 32, %s34
          %s1532 = ssub.s32 2048, 2048
          %1533 = vsyncadd %s1513, %s1532
          %s1534 = smul.addr %s33, 32
          %s1535 = sadd.s32 %s1530, %s1534
          %s1536 = smul.addr %s1535, 64
          %s1537 = scalar_lea.hbm %s5, %s1536
          %s1538 = sshll.u32 %s1516, 4
          %s1539 = int_to_ptr.vmem [resolvable:$true] %s1538
          %1544 = dma.vmem_to_hbm [thread:$0]  %s1539, 2048, %s1537, %s1513, 64, 64, 4
        $region56: #{tpu_custom_call.1} parent=39 // pred_fallthru
          _
        // Predicated region
        $region57: #{tpu_custom_call.1} parent=39 // pred_check
          %p1545 = pneg %p201
        $region58: #{tpu_custom_call.1} parent=39 // pred_check_branch
          %1547 = sbr.rel (%p1545) target = $region60
        $region59: #{tpu_custom_call.1} parent=39 // pred_region
          %s1548 = smul.u32 32, %s34
          %s1550 = ssub.s32 2048, 2048
          %1551 = vsyncadd %s1518, %s1550
          %s1552 = smul.addr %s33, 32
          %s1553 = sadd.s32 %s1548, %s1552
          %s1554 = smul.addr %s1553, 64
          %s1555 = scalar_lea.hbm %s6, %s1554
          %s1556 = sshll.u32 %s1521, 4
          %s1557 = int_to_ptr.vmem [resolvable:$true] %s1556
          %1562 = dma.vmem_to_hbm [thread:$0]  %s1557, 2048, %s1555, %s1518, 64, 64, 4
        $region60: #{tpu_custom_call.1} parent=39 // pred_fallthru
          _
        // Predicated region
        $region61: #{tpu_custom_call.1} parent=39 // pred_check
          %p1563 = pneg %p229
        $region62: #{tpu_custom_call.1} parent=39 // pred_check_branch
          %1565 = sbr.rel (%p1563) target = $region64
        $region63: #{tpu_custom_call.1} parent=39 // pred_region
          %s1566 = smul.u32 32, %s34
          %s1568 = ssub.s32 2048, 2048
          %1569 = vsyncadd %s1523, %s1568
          %s1570 = smul.addr %s33, 32
          %s1571 = sadd.s32 %s1566, %s1570
          %s1572 = smul.addr %s1571, 64
          %s1573 = scalar_lea.hbm %s7, %s1572
          %s1574 = sshll.u32 %s1526, 4
          %s1575 = int_to_ptr.vmem [resolvable:$true] %s1574
          %1580 = dma.vmem_to_hbm [thread:$0]  %s1575, 2048, %s1573, %s1523, 64, 64, 4
        $region64: #{tpu_custom_call.1} parent=39 // pred_fallthru
          _
      $region40: #{tpu_custom_call.1} parent=5 // pred_fallthru
        _
      %p1581 = scmp.le.s32.totalorder 2, %s24
      // Predicated region
      $region65: #{tpu_custom_call.1} parent=5 // pred_check
        %p1582 = pneg %p1581
      $region66: #{tpu_custom_call.1} parent=5 // pred_check_branch
        %1584 = sbr.rel (%p1582) target = $region68
      $region67: #{tpu_custom_call.1} parent=5 // pred_region
        %s1585 = ssub.s32 %s24, 2
        // Predicated region
        $region69: #{tpu_custom_call.1} parent=67 // pred_check
          %p1586 = pneg %p179
        $region70: #{tpu_custom_call.1} parent=67 // pred_check_branch
          %1588 = sbr.rel (%p1586) target = $region72
        $region71: #{tpu_custom_call.1} parent=67 // pred_region
          %s1589 = sand.u32 %s164, 1
          %s1590 = scalar_lea.sflag [#allocation4], %s1589
          %s1591 = sand.u32 %s164, 1
          %s1592 = smul.addr %s1591, 128
          %s1593 = scalar_lea.vmem [#allocation8], %s1592
          %1594 = dma.done %s1590, 2048
        $region72: #{tpu_custom_call.1} parent=67 // pred_fallthru
          _
        // Predicated region
        $region73: #{tpu_custom_call.1} parent=67 // pred_check
          %p1595 = pneg %p207
        $region74: #{tpu_custom_call.1} parent=67 // pred_check_branch
          %1597 = sbr.rel (%p1595) target = $region76
        $region75: #{tpu_custom_call.1} parent=67 // pred_region
          %s1598 = sand.u32 %s30, 1
          %s1599 = scalar_lea.sflag [#allocation10], %s1598
          %s1600 = sand.u32 %s192, 1
          %s1601 = smul.addr %s1600, 128
          %s1602 = scalar_lea.vmem [#allocation9], %s1601
          %1603 = dma.done %s1599, 2048
        $region76: #{tpu_custom_call.1} parent=67 // pred_fallthru
          _
        // Predicated region
        $region77: #{tpu_custom_call.1} parent=67 // pred_check
          %p1604 = pneg %p235
        $region78: #{tpu_custom_call.1} parent=67 // pred_check_branch
          %1606 = sbr.rel (%p1604) target = $region80
        $region79: #{tpu_custom_call.1} parent=67 // pred_region
          %s1607 = sand.u32 %s30, 1
          %s1608 = scalar_lea.sflag [#allocation10], %s1607
          %s1609 = sand.u32 %s220, 1
          %s1610 = smul.addr %s1609, 128
          %s1611 = scalar_lea.vmem [#allocation11], %s1610
          %1612 = dma.done %s1608, 2048
        $region80: #{tpu_custom_call.1} parent=67 // pred_fallthru
          _
      $region68: #{tpu_custom_call.1} parent=5 // pred_fallthru
        _
    $region6: #{tpu_custom_call.1} parent=1 // loop_footer
      %s28 = sadd.s32 1, %s24
    $region7: #{tpu_custom_call.1} parent=1 // loop_footer_branch
      %23 = sbr.rel target = $region3
    $region8: #{tpu_custom_call.1} parent=1 // loop_exit
      _
    %1613 = vsyncpa [#allocation3], 1
    %s1614 = scalar_lea.sflag [#allocation3], 1
    %1615 = vsyncpa %s1614, 1
    %1616 = vsyncpa [#allocation6], 1
    %1617 = vsyncpa [#allocation4], 1
    %s1618 = scalar_lea.sflag [#allocation4], 1
    %1619 = vsyncpa %s1618, 1
    %1620 = vsyncpa [#allocation10], 1
    %s1621 = scalar_lea.sflag [#allocation10], 1
    %1622 = vsyncpa %s1621, 1

</llo_original>
